<compile_context>
chip_gen: v6e
topology: v6e:2x2x1
jax: 0.10.0
libtpu: 0.0.40
codegen_flags: <defaults>
</compile_context>

<pallas_src>
import jax
import jax.numpy as jnp
from jax.experimental import pallas as pl
from jax.experimental.pallas import tpu as pltpu


_LANE = 128
_TILE_M = 128   # MXU-aligned row tile (fits v5e 128-wide MXU; fine on v6e/v7x)


# ----------------------------------------------------------------------------
# Fused two-layer GCN kernel.
# grid = (layer, row_tile); refs:
#   a_ref  : [TILE_M, N_pad]  bf16   row tile of normalized adjacency
#   x_ref  : [N_pad, F_pad]   bf16   node features (full)
#   w1_ref : [F_pad, H_pad]   bf16
#   b1_ref : [1, H_pad]       f32
#   w2_ref : [H_pad, O_pad]   bf16
#   b2_ref : [1, O_pad]       f32
#   o_ref  : [TILE_M, O_pad]  f32    output row tile
#   xw_scr : [N_pad, max(H_pad,O_pad)] bf16  per-layer feature transform
#   h_scr  : [N_pad, H_pad]   bf16   hidden activations (persist across grid)
# ----------------------------------------------------------------------------
def _fused_gcn_kernel(a_ref, x_ref, w1_ref, b1_ref, w2_ref, b2_ref,
                      o_ref, xw_scr, h_scr):
    layer = pl.program_id(0)            # 0 = conv1, 1 = conv2 (sequential)
    tile = pl.program_id(1)             # row tile of A_norm / output
    tile_m = a_ref.shape[0]
    h_pad = h_scr.shape[1]
    o_pad = o_ref.shape[1]

    # ---- per-layer prologue (first row tile only): feature transform on MXU
    @pl.when(jnp.logical_and(layer == 0, tile == 0))
    def _():
        xw = jnp.dot(x_ref[...], w1_ref[...],
                     preferred_element_type=jnp.float32)      # [N_pad, H_pad]
        xw_scr[:, :h_pad] = xw.astype(xw_scr.dtype)

    @pl.when(jnp.logical_and(layer == 1, tile == 0))
    def _():
        hw = jnp.dot(h_scr[...], w2_ref[...],
                     preferred_element_type=jnp.float32)      # [N_pad, O_pad]
        xw_scr[:, :o_pad] = hw.astype(xw_scr.dtype)

    # ---- neighborhood aggregation + f32 epilogue for this row tile ----------
    row0 = pl.multiple_of(tile * tile_m, tile_m)

    @pl.when(layer == 0)
    def _():
        agg = jnp.dot(a_ref[...], xw_scr[:, :h_pad],
                      preferred_element_type=jnp.float32)     # [TILE_M, H_pad]
        h = jnp.maximum(agg + b1_ref[...], 0.0)               # f32 VPU epilogue
        h_scr[pl.ds(row0, tile_m), :] = h.astype(h_scr.dtype)

    @pl.when(layer == 1)
    def _():
        agg = jnp.dot(a_ref[...], xw_scr[:, :o_pad],
                      preferred_element_type=jnp.float32)     # [TILE_M, O_pad]
        o_ref[...] = jnp.maximum(agg + b2_ref[...], 0.0).astype(o_ref.dtype)


# ----------------------------------------------------------------------------
# Plain-JAX glue: dense symmetric-normalized adjacency from edge_index.
# (Scatter-add build has no clean Pallas equivalent; kept as XLA glue.)
# Note: inputs with pre-existing self-loops / duplicate edges get weights > 1,
# same caveat as the dense PyG reconstruction.
# ----------------------------------------------------------------------------
def build_gcn_adj(edge_index, num_nodes):
    src, dst = edge_index[0], edge_index[1]
    a = jnp.zeros((num_nodes, num_nodes), jnp.float32)
    a = a.at[dst, src].add(1.0)                      # message flow src -> dst
    a = a + jnp.eye(num_nodes, dtype=jnp.float32)    # add self loops
    deg = a.sum(axis=1)
    d_inv_sqrt = jnp.where(deg > 0, 1.0 / jnp.sqrt(deg), 0.0)
    return d_inv_sqrt[:, None] * a * d_inv_sqrt[None, :]


def _round_up(v, m):
    return ((v + m - 1) // m) * m


# ----------------------------------------------------------------------------
# Full module forward
# ----------------------------------------------------------------------------
def gnn_material_predictor(x, edge_index, params):
    n, f_in = x.shape
    hidden = params["w1"].shape[1]
    out_dim = params["w2"].shape[1]

    n_pad = _round_up(n, _TILE_M)
    f_pad = _round_up(f_in, _LANE)
    h_pad = _round_up(hidden, _LANE)
    o_pad = _round_up(out_dim, _LANE)
    xw_pad = max(h_pad, o_pad)

    # plain-JAX glue: normalized adjacency, zero-padding, bf16 casts
    a_norm = build_gcn_adj(edge_index, n)
    a_p = jnp.zeros((n_pad, n_pad), jnp.bfloat16).at[:n, :n].set(
        a_norm.astype(jnp.bfloat16))
    x_p = jnp.zeros((n_pad, f_pad), jnp.bfloat16).at[:n, :f_in].set(
        x.astype(jnp.bfloat16))
    w1_p = jnp.zeros((f_pad, h_pad), jnp.bfloat16).at[:f_in, :hidden].set(
        params["w1"].astype(jnp.bfloat16))
    w2_p = jnp.zeros((h_pad, o_pad), jnp.bfloat16).at[:hidden, :out_dim].set(
        params["w2"].astype(jnp.bfloat16))
    b1_p = jnp.zeros((1, h_pad), jnp.float32).at[:, :hidden].set(params["b1"])
    b2_p = jnp.zeros((1, o_pad), jnp.float32).at[:, :out_dim].set(params["b2"])

    n_tiles = n_pad // _TILE_M
    grid = (2, n_tiles)     # (layer, row tile); layers must run sequentially

    flops = 2 * n_pad * (f_pad * h_pad + n_pad * h_pad
                         + h_pad * o_pad + n_pad * o_pad)
    bytes_accessed = (2 * (a_p.size + x_p.size + w1_p.size + w2_p.size)
                      + 4 * (b1_p.size + b2_p.size + n_pad * o_pad))

    out_p = pl.pallas_call(
        _fused_gcn_kernel,
        out_shape=jax.ShapeDtypeStruct((n_pad, o_pad), jnp.float32),
        grid_spec=pltpu.PrefetchScalarGridSpec(
            num_scalar_prefetch=0,
            grid=grid,
            in_specs=[
                pl.BlockSpec((_TILE_M, n_pad), lambda l, t: (t, 0)),   # A rows
                pl.BlockSpec((n_pad, f_pad), lambda l, t: (0, 0)),     # X
                pl.BlockSpec((f_pad, h_pad), lambda l, t: (0, 0)),     # W1
                pl.BlockSpec((1, h_pad), lambda l, t: (0, 0)),         # b1
                pl.BlockSpec((h_pad, o_pad), lambda l, t: (0, 0)),     # W2
                pl.BlockSpec((1, o_pad), lambda l, t: (0, 0)),         # b2
            ],
            out_specs=pl.BlockSpec((_TILE_M, o_pad), lambda l, t: (t, 0)),
            scratch_shapes=[
                pltpu.VMEM((n_pad, xw_pad), jnp.bfloat16),   # X@W1 / H@W2
                pltpu.VMEM((n_pad, h_pad), jnp.bfloat16),    # hidden H
            ]),
        compiler_params=pltpu.CompilerParams(
            # hidden H lives in per-core VMEM scratch shared across tiles and
            # layers -> the whole grid must run sequentially on one core.
            dimension_semantics=("arbitrary", "arbitrary")),
        cost_estimate=pl.CostEstimate(flops=flops, transcendentals=0,
                                      bytes_accessed=bytes_accessed),
    )(a_p, x_p, w1_p, b1_p, w2_p, b2_p)

    return out_p[:n, :out_dim]


def init_params(key, input_dim, hidden_dim, output_dim):
    k1, k2, k3, k4 = jax.random.split(key, 4)
    w1 = jax.random.normal(k1, (input_dim, hidden_dim), jnp.float32) * (
        1.0 / jnp.sqrt(jnp.float32(input_dim)))
    w2 = jax.random.normal(k2, (hidden_dim, output_dim), jnp.float32) * (
        1.0 / jnp.sqrt(jnp.float32(hidden_dim)))
    b1 = 0.1 * jax.random.normal(k3, (1, hidden_dim), jnp.float32)
    b2 = 0.1 * jax.random.normal(k4, (1, output_dim), jnp.float32)
    return {"w1": w1, "b1": b1, "w2": w2, "b2": b2}


if __name__ == "__main__":
    key = jax.random.PRNGKey(0)
    k_x, k_e, k_p = jax.random.split(key, 3)

    num_nodes = 64
    input_dim = 16
    hidden_dim = 32
    output_dim = 8
    num_edges = 128

    x = jax.random.normal(k_x, (num_nodes, input_dim), jnp.float32)
    edge_index = jax.random.randint(k_e, (2, num_edges), 0, num_nodes,
                                    dtype=jnp.int32)
    params = init_params(k_p, input_dim, hidden_dim, output_dim)

    out = gnn_material_predictor(x, edge_index, params)
    out = jax.block_until_ready(out)

    # Pure-JAX reference mirroring the kernel's bf16-operand / f32-accumulate
    # arithmetic (same roundings, so the comparison is tight).
    a = build_gcn_adj(edge_index, num_nodes)
    bf = lambda v: v.astype(jnp.bfloat16)

    def ref_layer(a_m, h, w, b):
        hw = jnp.dot(bf(h), bf(w), preferred_element_type=jnp.float32)
        return jnp.maximum(
            jnp.dot(bf(a_m), bf(hw), preferred_element_type=jnp.float32) + b,
            0.0)

    ref = ref_layer(a, x, params["w1"], params["b1"])
    ref = ref_layer(a, ref, params["w2"], params["b2"])

    assert out.shape == (num_nodes, output_dim)
    max_err = float(jnp.max(jnp.abs(out - ref)))
    assert jnp.allclose(out, ref, atol=1e-2, rtol=1e-2), max_err

    print("KERNEL_OK")
</pallas_src>

<mosaic_0001>
module attributes {stable_mosaic.version = 11 : i64} {
  func.func @_fused_gcn_kernel(%arg0: i32, %arg1: i32, %arg2: memref<128x128xbf16, #tpu.memory_space<vmem>>, %arg3: memref<128x128xbf16, #tpu.memory_space<vmem>>, %arg4: memref<128x128xbf16, #tpu.memory_space<vmem>>, %arg5: memref<1x128xf32, #tpu.memory_space<vmem>>, %arg6: memref<128x128xbf16, #tpu.memory_space<vmem>>, %arg7: memref<1x128xf32, #tpu.memory_space<vmem>>, %arg8: memref<128x128xf32, #tpu.memory_space<vmem>>, %arg9: memref<128x128xbf16, #tpu.memory_space<vmem>>, %arg10: memref<128x128xbf16, #tpu.memory_space<vmem>>) attributes {dimension_semantics = [#tpu.dimension_semantics<arbitrary>, #tpu.dimension_semantics<arbitrary>], iteration_bounds = array<i64: 2, 1>, scalar_prefetch = 0 : i64, scratch_operands = 2 : i64, tpu.core_type = #tpu.core_type<tc>, window_params = [{transform_indices = @transform_0, window_bounds = array<i64: 128, 128>}, {pipeline_mode = #tpu.pipeline_mode<synchronous>, transform_indices = @transform_1, window_bounds = array<i64: 128, 128>}, {pipeline_mode = #tpu.pipeline_mode<synchronous>, transform_indices = @transform_2, window_bounds = array<i64: 128, 128>}, {pipeline_mode = #tpu.pipeline_mode<synchronous>, transform_indices = @transform_3, window_bounds = array<i64: 1, 128>}, {pipeline_mode = #tpu.pipeline_mode<synchronous>, transform_indices = @transform_4, window_bounds = array<i64: 128, 128>}, {pipeline_mode = #tpu.pipeline_mode<synchronous>, transform_indices = @transform_5, window_bounds = array<i64: 1, 128>}, {transform_indices = @transform_6, window_bounds = array<i64: 128, 128>}]} {
    %c0_i32 = arith.constant 0 : i32
    %0 = arith.cmpi eq, %arg0, %c0_i32 : i32
    %c0_i32_0 = arith.constant 0 : i32
    %1 = arith.cmpi eq, %arg1, %c0_i32_0 : i32
    %2 = arith.andi %0, %1 : i1
    %3 = arith.extui %2 : i1 to i32
    %c0_i32_1 = arith.constant 0 : i32
    %4 = arith.cmpi ne, %3, %c0_i32_1 : i32
    scf.if %4 {
      %c0 = arith.constant 0 : index
      %c0_8 = arith.constant 0 : index
      %18 = vector.load %arg3[%c0, %c0_8] : memref<128x128xbf16, #tpu.memory_space<vmem>>, vector<128x128xbf16>
      %c0_9 = arith.constant 0 : index
      %c0_10 = arith.constant 0 : index
      %19 = vector.load %arg4[%c0_9, %c0_10] : memref<128x128xbf16, #tpu.memory_space<vmem>>, vector<128x128xbf16>
      %cst = arith.constant dense<0.000000e+00> : vector<128x128xf32>
      %20 = tpu.matmul %18, %19, %cst {dimension_numbers = #tpu.dot_dimension_numbers<[1], [0], [0], [1], [0, 0, 1, 1], [], []>} : vector<128x128xbf16>, vector<128x128xbf16>, vector<128x128xf32> -> vector<128x128xf32>
      %21 = arith.truncf %20 : vector<128x128xf32> to vector<128x128xbf16>
      %c0_11 = arith.constant 0 : index
      %c0_12 = arith.constant 0 : index
      %22 = vector.load %arg9[%c0_11, %c0_12] : memref<128x128xbf16, #tpu.memory_space<vmem>>, vector<128x128xbf16>
      tpu.vector_store %arg9[%c0_11, %c0_12], %21 {strides = array<i32>} : memref<128x128xbf16, #tpu.memory_space<vmem>>, vector<128x128xbf16>,
    } else {
    }
    %c1_i32 = arith.constant 1 : i32
    %5 = arith.cmpi eq, %arg0, %c1_i32 : i32
    %c0_i32_2 = arith.constant 0 : i32
    %6 = arith.cmpi eq, %arg1, %c0_i32_2 : i32
    %7 = arith.andi %5, %6 : i1
    %8 = arith.extui %7 : i1 to i32
    %c0_i32_3 = arith.constant 0 : i32
    %9 = arith.cmpi ne, %8, %c0_i32_3 : i32
    scf.if %9 {
      %c0 = arith.constant 0 : index
      %c0_8 = arith.constant 0 : index
      %18 = vector.load %arg10[%c0, %c0_8] : memref<128x128xbf16, #tpu.memory_space<vmem>>, vector<128x128xbf16>
      %c0_9 = arith.constant 0 : index
      %c0_10 = arith.constant 0 : index
      %19 = vector.load %arg6[%c0_9, %c0_10] : memref<128x128xbf16, #tpu.memory_space<vmem>>, vector<128x128xbf16>
      %cst = arith.constant dense<0.000000e+00> : vector<128x128xf32>
      %20 = tpu.matmul %18, %19, %cst {dimension_numbers = #tpu.dot_dimension_numbers<[1], [0], [0], [1], [0, 0, 1, 1], [], []>} : vector<128x128xbf16>, vector<128x128xbf16>, vector<128x128xf32> -> vector<128x128xf32>
      %21 = arith.truncf %20 : vector<128x128xf32> to vector<128x128xbf16>
      %c0_11 = arith.constant 0 : index
      %c0_12 = arith.constant 0 : index
      %22 = vector.load %arg9[%c0_11, %c0_12] : memref<128x128xbf16, #tpu.memory_space<vmem>>, vector<128x128xbf16>
      tpu.vector_store %arg9[%c0_11, %c0_12], %21 {strides = array<i32>} : memref<128x128xbf16, #tpu.memory_space<vmem>>, vector<128x128xbf16>,
    } else {
    }
    %c128_i32 = arith.constant 128 : i32
    %10 = arith.muli %arg1, %c128_i32 : i32
    %11 = tpu.assume_multiple %10, 128 : i32
    %c0_i32_4 = arith.constant 0 : i32
    %12 = arith.cmpi eq, %arg0, %c0_i32_4 : i32
    %13 = arith.extui %12 : i1 to i32
    %c0_i32_5 = arith.constant 0 : i32
    %14 = arith.cmpi ne, %13, %c0_i32_5 : i32
    scf.if %14 {
      %c0 = arith.constant 0 : index
      %c0_8 = arith.constant 0 : index
      %18 = vector.load %arg2[%c0, %c0_8] : memref<128x128xbf16, #tpu.memory_space<vmem>>, vector<128x128xbf16>
      %c0_9 = arith.constant 0 : index
      %c0_10 = arith.constant 0 : index
      %19 = vector.load %arg9[%c0_9, %c0_10] : memref<128x128xbf16, #tpu.memory_space<vmem>>, vector<128x128xbf16>
      %cst = arith.constant dense<0.000000e+00> : vector<128x128xf32>
      %20 = tpu.matmul %18, %19, %cst {dimension_numbers = #tpu.dot_dimension_numbers<[1], [0], [0], [1], [0, 0, 1, 1], [], []>} : vector<128x128xbf16>, vector<128x128xbf16>, vector<128x128xf32> -> vector<128x128xf32>
      %c0_11 = arith.constant 0 : index
      %c0_12 = arith.constant 0 : index
      %21 = vector.load %arg5[%c0_11, %c0_12] : memref<1x128xf32, #tpu.memory_space<vmem>>, vector<1x128xf32>
      %22 = vector.broadcast %21 : vector<1x128xf32> to vector<128x128xf32>
      %23 = arith.addf %20, %22 : vector<128x128xf32>
      %cst_13 = arith.constant 0.000000e+00 : f32
      %24 = vector.broadcast %cst_13 : f32 to vector<128x128xf32>
      %25 = arith.maximumf %23, %24 : vector<128x128xf32>
      %26 = arith.truncf %25 : vector<128x128xf32> to vector<128x128xbf16>
      %27 = arith.index_cast %11 : i32 to index
      %c0_14 = arith.constant 0 : index
      %28 = vector.load %arg10[%27, %c0_14] : memref<128x128xbf16, #tpu.memory_space<vmem>>, vector<128x128xbf16>
      tpu.vector_store %arg10[%27, %c0_14], %26 {strides = array<i32>} : memref<128x128xbf16, #tpu.memory_space<vmem>>, vector<128x128xbf16>,
    } else {
    }
    %c1_i32_6 = arith.constant 1 : i32
    %15 = arith.cmpi eq, %arg0, %c1_i32_6 : i32
    %16 = arith.extui %15 : i1 to i32
    %c0_i32_7 = arith.constant 0 : i32
    %17 = arith.cmpi ne, %16, %c0_i32_7 : i32
    scf.if %17 {
      %c0 = arith.constant 0 : index
      %c0_8 = arith.constant 0 : index
      %18 = vector.load %arg2[%c0, %c0_8] : memref<128x128xbf16, #tpu.memory_space<vmem>>, vector<128x128xbf16>
      %c0_9 = arith.constant 0 : index
      %c0_10 = arith.constant 0 : index
      %19 = vector.load %arg9[%c0_9, %c0_10] : memref<128x128xbf16, #tpu.memory_space<vmem>>, vector<128x128xbf16>
      %cst = arith.constant dense<0.000000e+00> : vector<128x128xf32>
      %20 = tpu.matmul %18, %19, %cst {dimension_numbers = #tpu.dot_dimension_numbers<[1], [0], [0], [1], [0, 0, 1, 1], [], []>} : vector<128x128xbf16>, vector<128x128xbf16>, vector<128x128xf32> -> vector<128x128xf32>
      %c0_11 = arith.constant 0 : index
      %c0_12 = arith.constant 0 : index
      %21 = vector.load %arg7[%c0_11, %c0_12] : memref<1x128xf32, #tpu.memory_space<vmem>>, vector<1x128xf32>
      %22 = vector.broadcast %21 : vector<1x128xf32> to vector<128x128xf32>
      %23 = arith.addf %20, %22 : vector<128x128xf32>
      %cst_13 = arith.constant 0.000000e+00 : f32
      %24 = vector.broadcast %cst_13 : f32 to vector<128x128xf32>
      %25 = arith.maximumf %23, %24 : vector<128x128xf32>
      %c0_14 = arith.constant 0 : index
      %c0_15 = arith.constant 0 : index
      %26 = vector.load %arg8[%c0_14, %c0_15] : memref<128x128xf32, #tpu.memory_space<vmem>>, vector<128x128xf32>
      tpu.vector_store %arg8[%c0_14, %c0_15], %25 {strides = array<i32>} : memref<128x128xf32, #tpu.memory_space<vmem>>, vector<128x128xf32>,
    } else {
    }
    return
  }
  func.func @transform_0(%arg0: i32, %arg1: i32) -> (i32, i32) {
    %c0_i32 = arith.constant 0 : i32
    %c0_i32_0 = arith.constant 0 : i32
    return %arg1, %c0_i32 : i32, i32
  }
  func.func @transform_1(%arg0: i32, %arg1: i32) -> (i32, i32) {
    %c0_i32 = arith.constant 0 : i32
    %c0_i32_0 = arith.constant 0 : i32
    %c0_i32_1 = arith.constant 0 : i32
    return %c0_i32, %c0_i32_0 : i32, i32
  }
  func.func @transform_2(%arg0: i32, %arg1: i32) -> (i32, i32) {
    %c0_i32 = arith.constant 0 : i32
    %c0_i32_0 = arith.constant 0 : i32
    %c0_i32_1 = arith.constant 0 : i32
    return %c0_i32, %c0_i32_0 : i32, i32
  }
  func.func @transform_3(%arg0: i32, %arg1: i32) -> (i32, i32) {
    %c0_i32 = arith.constant 0 : i32
    %c0_i32_0 = arith.constant 0 : i32
    %c0_i32_1 = arith.constant 0 : i32
    return %c0_i32, %c0_i32_0 : i32, i32
  }
  func.func @transform_4(%arg0: i32, %arg1: i32) -> (i32, i32) {
    %c0_i32 = arith.constant 0 : i32
    %c0_i32_0 = arith.constant 0 : i32
    %c0_i32_1 = arith.constant 0 : i32
    return %c0_i32, %c0_i32_0 : i32, i32
  }
  func.func @transform_5(%arg0: i32, %arg1: i32) -> (i32, i32) {
    %c0_i32 = arith.constant 0 : i32
    %c0_i32_0 = arith.constant 0 : i32
    %c0_i32_1 = arith.constant 0 : i32
    return %c0_i32, %c0_i32_0 : i32, i32
  }
  func.func @transform_6(%arg0: i32, %arg1: i32) -> (i32, i32) {
    %c0_i32 = arith.constant 0 : i32
    %c0_i32_0 = arith.constant 0 : i32
    return %arg1, %c0_i32 : i32, i32
  }
}

</mosaic_0001>

<llo_original>
// kernel: tpu_custom_call.1
$region0: #{tpu_custom_call.1}
  #allocation0 [shape = 'u32[]', space=smem, size = 0x4, offset = 0x4, fixed_abs, tag = 'smem constant byte address 0x4 - core index']
  #allocation1 [shape = 'u32[144,128]{1,0:T(1,128)}', space=vmem, size = 0x12000, scoped, tag = 'internal scratch']
  #allocation2 [shape = 'bf16[128,128]{1,0:T(8,128)(2,1)}', space=vmem, size = 0x8000, scoped, tag = 'scratch operand']
  #allocation3 [shape = 'bf16[128,128]{1,0:T(8,128)(2,1)}', space=vmem, size = 0x8000, scoped, tag = 'scratch operand']
  %s0 = inlined_call_operand.hbm [shape: bf16[128,128], index: 0, kind: input, shape index: {}]
  %s1 = inlined_call_operand.hbm [shape: bf16[128,128], index: 1, kind: input, shape index: {}]
  %s2 = inlined_call_operand.hbm [shape: bf16[128,128], index: 2, kind: input, shape index: {}]
  %s3 = inlined_call_operand.vmem [shape: f32[1,128], index: 3, kind: input, shape index: {}]
  %s4 = inlined_call_operand.hbm [shape: bf16[128,128], index: 4, kind: input, shape index: {}]
  %s5 = inlined_call_operand.vmem [shape: f32[1,128], index: 5, kind: input, shape index: {}]
  %s6 = inlined_call_operand.hbm [shape: f32[128,128], index: 6, kind: output, shape index: {}]
  %s7 = sld [smem:[#allocation0]]
  $region89: #{tpu_custom_call.1} parent=0
    _
  %s9 = ssub.s32 1, %s7
  %s10 = scalar_select 0, %s9, %s7
  $region1: #{tpu_custom_call.1} parent=0
    #allocation4 [shape = 'u8[32768]{0}', space=vmem, size = 0x8000, scoped, tag = 'input window, operand 0, single buffered']
    #allocation5 [shape = 's32[2]{0}', space=sflag, size = 0x8, scoped, tag = 'scoped memory for tpu_custom_call.1']
    #allocation6 [shape = 's32[2]{0}', space=sflag, size = 0x8, scoped, tag = 'scoped memory for tpu_custom_call.1']
    #allocation7 [shape = 'u8[32768]{0}', space=vmem, size = 0x8000, scoped, tag = 'input window, operand 1, single buffered']
    #allocation8 [shape = 's32[1]{0}', space=sflag, size = 0x4, scoped, tag = 'scoped memory for tpu_custom_call.1']
    #allocation9 [shape = 'u8[32768]{0}', space=vmem, size = 0x8000, scoped, tag = 'input window, operand 2, single buffered']
    #allocation10 [shape = 'u8[32768]{0}', space=vmem, size = 0x8000, scoped, tag = 'input window, operand 4, single buffered']
    #allocation11 [shape = 's32[1]{0}', space=sflag, size = 0x4, scoped, tag = 'scoped memory for tpu_custom_call.1']
    #allocation12 [shape = 'u8[65536]{0}', space=vmem, size = 0x10000, scoped, tag = 'output window, operand 0, single buffered']
    %11 = vsyncpa [#allocation5], 0
    %12 = vsyncpa [#allocation8], 0
    %13 = vsyncpa [#allocation11], 0
    %14 = vsyncpa [#allocation6], 0
    loop: start=0, step=1, limit=4
    $region2: #{tpu_custom_call.1} parent=1 // loop_pre_header
      _
    $region3: #{tpu_custom_call.1} parent=1 // loop_header
      %s16 = sphi 0, %s20
      %p17 = scmp.ge.s32.totalorder %s16, 4
      %s23 = sphi 0, %s35
      %s24 = sphi 0, %s31
      %s25 = sphi 0, %s23
      %s26 = sphi 0, %s24
      %s27 = sphi 0, %s25
      %s28 = sphi 0, %s26
      %s38 = sphi 0, %s40
      %s41 = sphi 0, %s38
      %s42 = sphi 0, %s41
      %s58 = sphi 0, %s42
      %s62 = sphi 0, %s62
      %s64 = sphi 0, %s62
      %s65 = sphi 0, %s64
      %s79 = sphi 0, %s65
      %s83 = sphi 0, %s83
      %s85 = sphi 0, %s83
      %s86 = sphi 0, %s85
      %s100 = sphi 0, %s86
      %s104 = sphi 0, %s104
      %s106 = sphi 0, %s104
      %s107 = sphi 0, %s106
      %s121 = sphi 0, %s107
      %s125 = sphi 0, %s125
      %s127 = sphi 0, %s125
      %s128 = sphi 0, %s127
      %s142 = sphi 0, %s128
      %s146 = sphi 0, %s146
      %s148 = sphi 0, %s146
      %s149 = sphi 0, %s148
      %s163 = sphi 0, %s149
      %s169 = sphi 0, %s171
      %s172 = sphi 0, %s169
      %s173 = sphi 0, %s172
      %s189 = sphi 0, %s173
    $region4: #{tpu_custom_call.1} parent=1 // loop_header_branch
      %19 = sbr.rel (%p17) target = $region8
    $region5: #{tpu_custom_call.1} parent=1 // loop_body
      %s21 = ssub.s32 %s16, 1
      %s22 = ssub.s32 %s16, 2
      %s29 = sadd.s32 1, %s24
      %p30 = scmp.ge.s32.totalorder %s29, 1
      %s31 = scalar_select %p30, 0, %s29
      %s32 = sadd.s32 1, %s23
      %s33 = scalar_select %p30, %s32, %s23
      %p34 = scmp.ge.s32.totalorder %s33, 2
      %s35 = scalar_select %p34, 0, %s33
      %s36 = ssub.s32 %s24, %s31
      %p37 = scmp.eq.s32.totalorder %s36, 0
      %s39 = sadd.s32 %s38, 1
      %s40 = scalar_select %p37, %s38, %s39
      %p43 = pneg %p37
      %p44 = scmp.eq.s32.totalorder %s16, 1
      %p45 = por %p43, %p44
      %p46 = scmp.ne.s32.totalorder %s38, %s41
      %p47 = scmp.eq.s32.totalorder %s16, 0
      %p48 = por %p46, %p47
      %p49 = scmp.ne.s32.totalorder %s38, %s41
      %p50 = scmp.eq.s32.totalorder %s21, 1
      %p51 = por %p49, %p50
      %p52 = scmp.ne.s32.totalorder %s41, %s42
      %p53 = scmp.eq.s32.totalorder %s21, 0
      %p54 = por %p52, %p53
      %p55 = scmp.ne.s32.totalorder %s41, %s42
      %p56 = scmp.eq.s32.totalorder %s22, 1
      %p57 = por %p55, %p56
      %p59 = scmp.ne.s32.totalorder %s42, %s58
      %p60 = scmp.eq.s32.totalorder %s22, 0
      %p61 = por %p59, %p60
      %s63 = sadd.s32 %s62, 1
      %p66 = scmp.eq.s32.totalorder %s16, 1
      %p67 = scmp.ne.s32.totalorder %s62, %s64
      %p68 = scmp.eq.s32.totalorder %s16, 0
      %p69 = por %p67, %p68
      %p70 = scmp.ne.s32.totalorder %s62, %s64
      %p71 = scmp.eq.s32.totalorder %s21, 1
      %p72 = por %p70, %p71
      %p73 = scmp.ne.s32.totalorder %s64, %s65
      %p74 = scmp.eq.s32.totalorder %s21, 0
      %p75 = por %p73, %p74
      %p76 = scmp.ne.s32.totalorder %s64, %s65
      %p77 = scmp.eq.s32.totalorder %s22, 1
      %p78 = por %p76, %p77
      %p80 = scmp.ne.s32.totalorder %s65, %s79
      %p81 = scmp.eq.s32.totalorder %s22, 0
      %p82 = por %p80, %p81
      %s84 = sadd.s32 %s83, 1
      %p87 = scmp.eq.s32.totalorder %s16, 1
      %p88 = scmp.ne.s32.totalorder %s83, %s85
      %p89 = scmp.eq.s32.totalorder %s16, 0
      %p90 = por %p88, %p89
      %p91 = scmp.ne.s32.totalorder %s83, %s85
      %p92 = scmp.eq.s32.totalorder %s21, 1
      %p93 = por %p91, %p92
      %p94 = scmp.ne.s32.totalorder %s85, %s86
      %p95 = scmp.eq.s32.totalorder %s21, 0
      %p96 = por %p94, %p95
      %p97 = scmp.ne.s32.totalorder %s85, %s86
      %p98 = scmp.eq.s32.totalorder %s22, 1
      %p99 = por %p97, %p98
      %p101 = scmp.ne.s32.totalorder %s86, %s100
      %p102 = scmp.eq.s32.totalorder %s22, 0
      %p103 = por %p101, %p102
      %s105 = sadd.s32 %s104, 1
      %p108 = scmp.eq.s32.totalorder %s16, 1
      %p109 = scmp.ne.s32.totalorder %s104, %s106
      %p110 = scmp.eq.s32.totalorder %s16, 0
      %p111 = por %p109, %p110
      %p112 = scmp.ne.s32.totalorder %s104, %s106
      %p113 = scmp.eq.s32.totalorder %s21, 1
      %p114 = por %p112, %p113
      %p115 = scmp.ne.s32.totalorder %s106, %s107
      %p116 = scmp.eq.s32.totalorder %s21, 0
      %p117 = por %p115, %p116
      %p118 = scmp.ne.s32.totalorder %s106, %s107
      %p119 = scmp.eq.s32.totalorder %s22, 1
      %p120 = por %p118, %p119
      %p122 = scmp.ne.s32.totalorder %s107, %s121
      %p123 = scmp.eq.s32.totalorder %s22, 0
      %p124 = por %p122, %p123
      %s126 = sadd.s32 %s125, 1
      %p129 = scmp.eq.s32.totalorder %s16, 1
      %p130 = scmp.ne.s32.totalorder %s125, %s127
      %p131 = scmp.eq.s32.totalorder %s16, 0
      %p132 = por %p130, %p131
      %p133 = scmp.ne.s32.totalorder %s125, %s127
      %p134 = scmp.eq.s32.totalorder %s21, 1
      %p135 = por %p133, %p134
      %p136 = scmp.ne.s32.totalorder %s127, %s128
      %p137 = scmp.eq.s32.totalorder %s21, 0
      %p138 = por %p136, %p137
      %p139 = scmp.ne.s32.totalorder %s127, %s128
      %p140 = scmp.eq.s32.totalorder %s22, 1
      %p141 = por %p139, %p140
      %p143 = scmp.ne.s32.totalorder %s128, %s142
      %p144 = scmp.eq.s32.totalorder %s22, 0
      %p145 = por %p143, %p144
      %s147 = sadd.s32 %s146, 1
      %p150 = scmp.eq.s32.totalorder %s16, 1
      %p151 = scmp.ne.s32.totalorder %s146, %s148
      %p152 = scmp.eq.s32.totalorder %s16, 0
      %p153 = por %p151, %p152
      %p154 = scmp.ne.s32.totalorder %s146, %s148
      %p155 = scmp.eq.s32.totalorder %s21, 1
      %p156 = por %p154, %p155
      %p157 = scmp.ne.s32.totalorder %s148, %s149
      %p158 = scmp.eq.s32.totalorder %s21, 0
      %p159 = por %p157, %p158
      %p160 = scmp.ne.s32.totalorder %s148, %s149
      %p161 = scmp.eq.s32.totalorder %s22, 1
      %p162 = por %p160, %p161
      %p164 = scmp.ne.s32.totalorder %s149, %s163
      %p165 = scmp.eq.s32.totalorder %s22, 0
      %p166 = por %p164, %p165
      %s167 = ssub.s32 %s24, %s31
      %p168 = scmp.eq.s32.totalorder %s167, 0
      %s170 = sadd.s32 %s169, 1
      %s171 = scalar_select %p168, %s169, %s170
      %p174 = pneg %p168
      %p175 = scmp.eq.s32.totalorder %s16, 1
      %p176 = por %p174, %p175
      %p177 = scmp.ne.s32.totalorder %s169, %s172
      %p178 = scmp.eq.s32.totalorder %s16, 0
      %p179 = por %p177, %p178
      %p180 = scmp.ne.s32.totalorder %s169, %s172
      %p181 = scmp.eq.s32.totalorder %s21, 1
      %p182 = por %p180, %p181
      %p183 = scmp.ne.s32.totalorder %s172, %s173
      %p184 = scmp.eq.s32.totalorder %s21, 0
      %p185 = por %p183, %p184
      %p186 = scmp.ne.s32.totalorder %s172, %s173
      %p187 = scmp.eq.s32.totalorder %s22, 1
      %p188 = por %p186, %p187
      %p190 = scmp.ne.s32.totalorder %s173, %s189
      %p191 = scmp.eq.s32.totalorder %s22, 0
      %p192 = por %p190, %p191
      %p193 = scmp.le.s32.totalorder 1, %s16
      %p194 = scmp.lt.s32.totalorder %s16, 3
      %p195 = pnand %p193, %p194
      %p196 = pneg %p195
      // Predicated region
      $region9: #{tpu_custom_call.1} parent=5 // pred_check
        _
      $region10: #{tpu_custom_call.1} parent=5 // pred_check_branch
        %198 = sbr.rel (%p195) target = $region12
      $region11: #{tpu_custom_call.1} parent=5 // pred_region
        %s199 = ssub.s32 %s16, 1
        // Predicated region
        $region13: #{tpu_custom_call.1} parent=11 // pred_check
          %p200 = pneg %p54
        $region14: #{tpu_custom_call.1} parent=11 // pred_check_branch
          %202 = sbr.rel (%p200) target = $region16
        $region15: #{tpu_custom_call.1} parent=11 // pred_region
          %s203 = smul.u32 16, %s26
          %s205 = ssub.s32 1024, 1024
          %206 = vsyncadd [#allocation5], %s205
          %s207 = smul.addr %s203, 64
          %s208 = scalar_lea.hbm %s0, %s207
          %s209 = sshll.u32 [#allocation4], 4
          %s210 = int_to_ptr.vmem [resolvable:$true] %s209
          %215 = dma.hbm_to_vmem [thread:$0]  %s208, 1024, %s210, [#allocation5], 64, 64, 4
        $region16: #{tpu_custom_call.1} parent=11 // pred_fallthru
          _
        // Predicated region
        $region17: #{tpu_custom_call.1} parent=11 // pred_check
          %p216 = pneg %p75
        $region18: #{tpu_custom_call.1} parent=11 // pred_check_branch
          %218 = sbr.rel (%p216) target = $region20
        $region19: #{tpu_custom_call.1} parent=11 // pred_region
          %s220 = ssub.s32 1024, 1024
          %221 = vsyncadd [#allocation8], %s220
          %s222 = sshll.u32 [#allocation7], 4
          %s223 = int_to_ptr.vmem [resolvable:$true] %s222
          %228 = dma.hbm_to_vmem [thread:$0]  %s1, 1024, %s223, [#allocation8], 64, 64, 4
        $region20: #{tpu_custom_call.1} parent=11 // pred_fallthru
          _
        // Predicated region
        $region21: #{tpu_custom_call.1} parent=11 // pred_check
          %p229 = pneg %p96
        $region22: #{tpu_custom_call.1} parent=11 // pred_check_branch
          %231 = sbr.rel (%p229) target = $region24
        $region23: #{tpu_custom_call.1} parent=11 // pred_region
          %s233 = ssub.s32 1024, 1024
          %234 = vsyncadd [#allocation8], %s233
          %s235 = sshll.u32 [#allocation9], 4
          %s236 = int_to_ptr.vmem [resolvable:$true] %s235
          %241 = dma.hbm_to_vmem [thread:$0]  %s2, 1024, %s236, [#allocation8], 64, 64, 4
        $region24: #{tpu_custom_call.1} parent=11 // pred_fallthru
          _
        // Predicated region
        $region25: #{tpu_custom_call.1} parent=11 // pred_check
          %p242 = pneg %p117
        $region26: #{tpu_custom_call.1} parent=11 // pred_check_branch
          %244 = sbr.rel (%p242) target = $region28
        $region27: #{tpu_custom_call.1} parent=11 // pred_region
          _
        $region28: #{tpu_custom_call.1} parent=11 // pred_fallthru
          _
        // Predicated region
        $region29: #{tpu_custom_call.1} parent=11 // pred_check
          %p245 = pneg %p138
        $region30: #{tpu_custom_call.1} parent=11 // pred_check_branch
          %247 = sbr.rel (%p245) target = $region32
        $region31: #{tpu_custom_call.1} parent=11 // pred_region
          %s249 = ssub.s32 1024, 1024
          %250 = vsyncadd [#allocation11], %s249
          %s251 = sshll.u32 [#allocation10], 4
          %s252 = int_to_ptr.vmem [resolvable:$true] %s251
          %257 = dma.hbm_to_vmem [thread:$0]  %s4, 1024, %s252, [#allocation11], 64, 64, 4
        $region32: #{tpu_custom_call.1} parent=11 // pred_fallthru
          _
        // Predicated region
        $region33: #{tpu_custom_call.1} parent=11 // pred_check
          %p258 = pneg %p159
        $region34: #{tpu_custom_call.1} parent=11 // pred_check_branch
          %260 = sbr.rel (%p258) target = $region36
        $region35: #{tpu_custom_call.1} parent=11 // pred_region
          _
        $region36: #{tpu_custom_call.1} parent=11 // pred_fallthru
          _
      $region12: #{tpu_custom_call.1} parent=5 // pred_fallthru
        _
      %p261 = scmp.lt.s32.totalorder %s16, 2
      // Predicated region
      $region37: #{tpu_custom_call.1} parent=5 // pred_check
        %p262 = pneg %p261
      $region38: #{tpu_custom_call.1} parent=5 // pred_check_branch
        %264 = sbr.rel (%p262) target = $region40
      $region39: #{tpu_custom_call.1} parent=5 // pred_region
        _
      $region40: #{tpu_custom_call.1} parent=5 // pred_fallthru
        _
      %p265 = scmp.le.s32.totalorder 1, %s16
      %p266 = scmp.lt.s32.totalorder %s16, 3
      %p267 = pnand %p265, %p266
      %p268 = pneg %p267
      // Predicated region
      $region41: #{tpu_custom_call.1} parent=5 // pred_check
        _
      $region42: #{tpu_custom_call.1} parent=5 // pred_check_branch
        %270 = sbr.rel (%p267) target = $region44
      $region43: #{tpu_custom_call.1} parent=5 // pred_region
        %s271 = ssub.s32 %s16, 1
        // Predicated region
        $region45: #{tpu_custom_call.1} parent=43 // pred_check
          %p272 = pneg %p54
        $region46: #{tpu_custom_call.1} parent=43 // pred_check_branch
          %274 = sbr.rel (%p272) target = $region48
        $region47: #{tpu_custom_call.1} parent=43 // pred_region
          %275 = dma.done [#allocation5], 1024
        $region48: #{tpu_custom_call.1} parent=43 // pred_fallthru
          _
        // Predicated region
        $region49: #{tpu_custom_call.1} parent=43 // pred_check
          %p276 = pneg %p75
        $region50: #{tpu_custom_call.1} parent=43 // pred_check_branch
          %278 = sbr.rel (%p276) target = $region52
        $region51: #{tpu_custom_call.1} parent=43 // pred_region
          %279 = dma.done [#allocation8], 1024
        $region52: #{tpu_custom_call.1} parent=43 // pred_fallthru
          _
        // Predicated region
        $region53: #{tpu_custom_call.1} parent=43 // pred_check
          %p280 = pneg %p96
        $region54: #{tpu_custom_call.1} parent=43 // pred_check_branch
          %282 = sbr.rel (%p280) target = $region56
        $region55: #{tpu_custom_call.1} parent=43 // pred_region
          %283 = dma.done [#allocation8], 1024
        $region56: #{tpu_custom_call.1} parent=43 // pred_fallthru
          _
        // Predicated region
        $region57: #{tpu_custom_call.1} parent=43 // pred_check
          %p284 = pneg %p138
        $region58: #{tpu_custom_call.1} parent=43 // pred_check_branch
          %286 = sbr.rel (%p284) target = $region60
        $region59: #{tpu_custom_call.1} parent=43 // pred_region
          %287 = dma.done [#allocation11], 1024
        $region60: #{tpu_custom_call.1} parent=43 // pred_fallthru
          _
        %p288 = pneg %p54
        %p289 = pneg %p51
        %p290 = pneg %p75
        %p291 = pneg %p72
        %p292 = pneg %p96
        %p293 = pneg %p93
        %p294 = pneg %p117
        %p295 = pneg %p114
        %p296 = pneg %p138
        %p297 = pneg %p135
        %p298 = pneg %p159
        %p299 = pneg %p156
        %p300 = pneg %p185
        %p301 = pneg %p182
        %s302 = smul.u32 16, %s26
        %s303 = smul.u32 16, %s26
        %p305 = scmp.eq.s32.totalorder %s25, 0
        %p306 = scmp.eq.s32.totalorder %s26, 0
        %p307 = pnand %p305, %p306
        %p308 = pneg %p307
        // Predicated region
        $region61: #{tpu_custom_call.1} parent=43 // pred_check
          _
        $region62: #{tpu_custom_call.1} parent=43 // pred_check_branch
          %310 = sbr.rel (%p307) target = $region64
        $region63: #{tpu_custom_call.1} parent=43 // pred_region
          %v311 = vld [vmem:[#allocation7] sm:$0xf]
          %v312 = vld [vmem:[#allocation7 + $0x4] sm:$0xf]
          %v313 = vld [vmem:[#allocation7 + $0x8] sm:$0xf]
          %v314 = vld [vmem:[#allocation7 + $0xc] sm:$0xf]
          %v315 = vld [vmem:[#allocation7 + $0x10] sm:$0xf]
          %v316 = vld [vmem:[#allocation7 + $0x14] sm:$0xf]
          %v317 = vld [vmem:[#allocation7 + $0x18] sm:$0xf]
          %v318 = vld [vmem:[#allocation7 + $0x1c] sm:$0xf]
          %v319 = vld [vmem:[#allocation7 + $0x20] sm:$0xf]
          %v320 = vld [vmem:[#allocation7 + $0x24] sm:$0xf]
          %v321 = vld [vmem:[#allocation7 + $0x28] sm:$0xf]
          %v322 = vld [vmem:[#allocation7 + $0x2c] sm:$0xf]
          %v323 = vld [vmem:[#allocation7 + $0x30] sm:$0xf]
          %v324 = vld [vmem:[#allocation7 + $0x34] sm:$0xf]
          %v325 = vld [vmem:[#allocation7 + $0x38] sm:$0xf]
          %v326 = vld [vmem:[#allocation7 + $0x3c] sm:$0xf]
          %v327 = vld [vmem:[#allocation9] sm:$0xf]
          %v328 = vld [vmem:[#allocation9 + $0x4] sm:$0xf]
          %v329 = vld [vmem:[#allocation9 + $0x8] sm:$0xf]
          %v330 = vld [vmem:[#allocation9 + $0xc] sm:$0xf]
          %v331 = vld [vmem:[#allocation9 + $0x10] sm:$0xf]
          %v332 = vld [vmem:[#allocation9 + $0x14] sm:$0xf]
          %v333 = vld [vmem:[#allocation9 + $0x18] sm:$0xf]
          %v334 = vld [vmem:[#allocation9 + $0x1c] sm:$0xf]
          %v335 = vld [vmem:[#allocation9 + $0x20] sm:$0xf]
          %v336 = vld [vmem:[#allocation9 + $0x24] sm:$0xf]
          %v337 = vld [vmem:[#allocation9 + $0x28] sm:$0xf]
          %v338 = vld [vmem:[#allocation9 + $0x2c] sm:$0xf]
          %v339 = vld [vmem:[#allocation9 + $0x30] sm:$0xf]
          %v340 = vld [vmem:[#allocation9 + $0x34] sm:$0xf]
          %v341 = vld [vmem:[#allocation9 + $0x38] sm:$0xf]
          %v342 = vld [vmem:[#allocation9 + $0x3c] sm:$0xf]
          %v359 = vunpack.c.l.b16 %v311
          %v360 = vunpack.c.l.b16 %v312
          %v361 = vunpack.c.l.b16 %v313
          %v362 = vunpack.c.l.b16 %v314
          %v363 = vunpack.c.l.b16 %v315
          %v364 = vunpack.c.l.b16 %v316
          %v365 = vunpack.c.l.b16 %v317
          %v366 = vunpack.c.l.b16 %v318
          %v367 = vunpack.c.l.b16 %v319
          %v368 = vunpack.c.l.b16 %v320
          %v369 = vunpack.c.l.b16 %v321
          %v370 = vunpack.c.l.b16 %v322
          %v371 = vunpack.c.l.b16 %v323
          %v372 = vunpack.c.l.b16 %v324
          %v373 = vunpack.c.l.b16 %v325
          %v374 = vunpack.c.l.b16 %v326
          %v375 = vpack.c.b16 %v360, %v359
          %v376 = vpack.c.b16 %v362, %v361
          %v377 = vpack.c.b16 %v364, %v363
          %v378 = vpack.c.b16 %v366, %v365
          %v379 = vpack.c.b16 %v368, %v367
          %v380 = vpack.c.b16 %v370, %v369
          %v381 = vpack.c.b16 %v372, %v371
          %v382 = vpack.c.b16 %v374, %v373
          %v407 = vunpack.c.l.b16 %v327
          %v408 = vunpack.c.l.b16 %v328
          %v409 = vunpack.c.l.b16 %v329
          %v410 = vunpack.c.l.b16 %v330
          %v411 = vunpack.c.l.b16 %v331
          %v412 = vunpack.c.l.b16 %v332
          %v413 = vunpack.c.l.b16 %v333
          %v414 = vunpack.c.l.b16 %v334
          %v415 = vunpack.c.l.b16 %v335
          %v416 = vunpack.c.l.b16 %v336
          %v417 = vunpack.c.l.b16 %v337
          %v418 = vunpack.c.l.b16 %v338
          %v419 = vunpack.c.l.b16 %v339
          %v420 = vunpack.c.l.b16 %v340
          %v421 = vunpack.c.l.b16 %v341
          %v422 = vunpack.c.l.b16 %v342
          %v423 = vpack.c.b16 %v408, %v407
          %v424 = vpack.c.b16 %v410, %v409
          %v425 = vpack.c.b16 %v412, %v411
          %v426 = vpack.c.b16 %v414, %v413
          %v427 = vpack.c.b16 %v416, %v415
          %v428 = vpack.c.b16 %v418, %v417
          %v429 = vpack.c.b16 %v420, %v419
          %v430 = vpack.c.b16 %v422, %v421
          %439 = vmatprep.subr.bf16.mxu0 0
          %440 = vmatpush1.bf16.msra.mxu0 %v430
          %441 = vmatprep.subr.bf16.mxu0 0
          %442 = vmatpush1.bf16.msra.mxu0 %v429
          %443 = vmatprep.subr.bf16.mxu0 0
          %444 = vmatpush1.bf16.msra.mxu0 %v428
          %445 = vmatprep.subr.bf16.mxu0 0
          %446 = vmatpush1.bf16.msra.mxu0 %v427
          %447 = vmatprep.subr.bf16.mxu0 0
          %448 = vmatpush1.bf16.msra.mxu0 %v426
          %449 = vmatprep.subr.bf16.mxu0 0
          %450 = vmatpush1.bf16.msra.mxu0 %v425
          %451 = vmatprep.subr.bf16.mxu0 0
          %452 = vmatpush1.bf16.msra.mxu0 %v424
          %453 = vmatprep.subr.bf16.mxu0 0
          %454 = vmatpush1.bf16.msra.mxu0 %v423
          %455 = vmatprep.subr.bf16.mxu0 0
          %456 = vmatpush2.bf16.msra.mxu0 0
          %457 = vmatprep.subr.bf16.mxu0 0
          %458 = vmatpush2.bf16.msra.mxu0 0
          %459 = vmatprep.subr.bf16.mxu0 0
          %460 = vmatpush2.bf16.msra.mxu0 0
          %461 = vmatprep.subr.bf16.mxu0 0
          %462 = vmatpush2.bf16.msra.mxu0 0
          %463 = vmatprep.subr.bf16.mxu0 0
          %464 = vmatpush2.bf16.msra.mxu0 0
          %465 = vmatprep.subr.bf16.mxu0 0
          %466 = vmatpush2.bf16.msra.mxu0 0
          %467 = vmatprep.subr.bf16.mxu0 0
          %468 = vmatpush2.bf16.msra.mxu0 0
          %469 = vmatprep.subr.bf16.mxu0 0
          %470 = vmatpush2.bf16.msra.mxu0 0
          %471 = vmatprep.mubr.bf16.mxu0 0
          %472 = vmatmul.mubr.bf16.gmra.mxu0 %v375
          %v473 = vpop.f32.mrf.mxu0
          %v474 = vadd.f32 0.0, %v473
          %v475 = vpop.f32.mrf.mxu0
          %v476 = vpop.f32.mrf.mxu0
          %v477 = vadd.f32 0.0, %v476
          %v478 = vpop.f32.mrf.mxu0
          %479 = vmatprep.mubr.bf16.mxu0 0
          %480 = vmatmul.mubr.bf16.gmra.mxu0 %v376
          %v481 = vpop.f32.mrf.mxu0
          %v482 = vadd.f32 0.0, %v481
          %v483 = vpop.f32.mrf.mxu0
          %v484 = vpop.f32.mrf.mxu0
          %v485 = vadd.f32 0.0, %v484
          %v486 = vpop.f32.mrf.mxu0
          %487 = vmatprep.mubr.bf16.mxu0 0
          %488 = vmatmul.mubr.bf16.gmra.mxu0 %v377
          %v489 = vpop.f32.mrf.mxu0
          %v490 = vadd.f32 0.0, %v489
          %v491 = vpop.f32.mrf.mxu0
          %v492 = vpop.f32.mrf.mxu0
          %v493 = vadd.f32 0.0, %v492
          %v494 = vpop.f32.mrf.mxu0
          %495 = vmatprep.mubr.bf16.mxu0 0
          %496 = vmatmul.mubr.bf16.gmra.mxu0 %v378
          %v497 = vpop.f32.mrf.mxu0
          %v498 = vadd.f32 0.0, %v497
          %v499 = vpop.f32.mrf.mxu0
          %v500 = vpop.f32.mrf.mxu0
          %v501 = vadd.f32 0.0, %v500
          %v502 = vpop.f32.mrf.mxu0
          %503 = vmatprep.mubr.bf16.mxu0 0
          %504 = vmatmul.mubr.bf16.gmra.mxu0 %v379
          %v505 = vpop.f32.mrf.mxu0
          %v506 = vadd.f32 0.0, %v505
          %v507 = vpop.f32.mrf.mxu0
          %v508 = vpop.f32.mrf.mxu0
          %v509 = vadd.f32 0.0, %v508
          %v510 = vpop.f32.mrf.mxu0
          %511 = vmatprep.mubr.bf16.mxu0 0
          %512 = vmatmul.mubr.bf16.gmra.mxu0 %v380
          %v513 = vpop.f32.mrf.mxu0
          %v514 = vadd.f32 0.0, %v513
          %v515 = vpop.f32.mrf.mxu0
          %v516 = vpop.f32.mrf.mxu0
          %v517 = vadd.f32 0.0, %v516
          %v518 = vpop.f32.mrf.mxu0
          %519 = vmatprep.mubr.bf16.mxu0 0
          %520 = vmatmul.mubr.bf16.gmra.mxu0 %v381
          %v521 = vpop.f32.mrf.mxu0
          %v522 = vadd.f32 0.0, %v521
          %v523 = vpop.f32.mrf.mxu0
          %v524 = vpop.f32.mrf.mxu0
          %v525 = vadd.f32 0.0, %v524
          %v526 = vpop.f32.mrf.mxu0
          %527 = vmatprep.mubr.bf16.mxu0 0
          %528 = vmatmul.mubr.bf16.gmra.mxu0 %v382
          %v529 = vpop.f32.mrf.mxu0
          %v530 = vadd.f32 0.0, %v529
          %v531 = vpop.f32.mrf.mxu0
          %v532 = vpop.f32.mrf.mxu0
          %v533 = vadd.f32 0.0, %v532
          %v534 = vpop.f32.mrf.mxu0
          %535 = vdwg.mxu0
          %v536 = vpack.c.bf16 %v477, %v474
          %v537 = vpack.c.bf16 %v485, %v482
          %v538 = vpack.c.bf16 %v493, %v490
          %v539 = vpack.c.bf16 %v501, %v498
          %v540 = vpack.c.bf16 %v509, %v506
          %v541 = vpack.c.bf16 %v517, %v514
          %v542 = vpack.c.bf16 %v525, %v522
          %v543 = vpack.c.bf16 %v533, %v530
          %v552 = vunpack.c.l.b16 %v536
          %v553 = vunpack.c.h.b16 %v536
          %v554 = vunpack.c.l.b16 %v537
          %v555 = vunpack.c.h.b16 %v537
          %v556 = vunpack.c.l.b16 %v538
          %v557 = vunpack.c.h.b16 %v538
          %v558 = vunpack.c.l.b16 %v539
          %v559 = vunpack.c.h.b16 %v539
          %v560 = vunpack.c.l.b16 %v540
          %v561 = vunpack.c.h.b16 %v540
          %v562 = vunpack.c.l.b16 %v541
          %v563 = vunpack.c.h.b16 %v541
          %v564 = vunpack.c.l.b16 %v542
          %v565 = vunpack.c.h.b16 %v542
          %v566 = vunpack.c.l.b16 %v543
          %v567 = vunpack.c.h.b16 %v543
          %v568 = vpack.c.b16 %v552, %v552
          %v569 = vpack.c.b16 %v553, %v553
          %v570 = vpack.c.b16 %v554, %v554
          %v571 = vpack.c.b16 %v555, %v555
          %v572 = vpack.c.b16 %v556, %v556
          %v573 = vpack.c.b16 %v557, %v557
          %v574 = vpack.c.b16 %v558, %v558
          %v575 = vpack.c.b16 %v559, %v559
          %v576 = vpack.c.b16 %v560, %v560
          %v577 = vpack.c.b16 %v561, %v561
          %v578 = vpack.c.b16 %v562, %v562
          %v579 = vpack.c.b16 %v563, %v563
          %v580 = vpack.c.b16 %v564, %v564
          %v581 = vpack.c.b16 %v565, %v565
          %v582 = vpack.c.b16 %v566, %v566
          %v583 = vpack.c.b16 %v567, %v567
          %600 = vst [vmem:[#allocation2] sm:$0xf] %v568
          %601 = vst [vmem:[#allocation2 + $0x4] sm:$0xf] %v569
          %602 = vst [vmem:[#allocation2 + $0x8] sm:$0xf] %v570
          %603 = vst [vmem:[#allocation2 + $0xc] sm:$0xf] %v571
          %604 = vst [vmem:[#allocation2 + $0x10] sm:$0xf] %v572
          %605 = vst [vmem:[#allocation2 + $0x14] sm:$0xf] %v573
          %606 = vst [vmem:[#allocation2 + $0x18] sm:$0xf] %v574
          %607 = vst [vmem:[#allocation2 + $0x1c] sm:$0xf] %v575
          %608 = vst [vmem:[#allocation2 + $0x20] sm:$0xf] %v576
          %609 = vst [vmem:[#allocation2 + $0x24] sm:$0xf] %v577
          %610 = vst [vmem:[#allocation2 + $0x28] sm:$0xf] %v578
          %611 = vst [vmem:[#allocation2 + $0x2c] sm:$0xf] %v579
          %612 = vst [vmem:[#allocation2 + $0x30] sm:$0xf] %v580
          %613 = vst [vmem:[#allocation2 + $0x34] sm:$0xf] %v581
          %614 = vst [vmem:[#allocation2 + $0x38] sm:$0xf] %v582
          %615 = vst [vmem:[#allocation2 + $0x3c] sm:$0xf] %v583
        $region64: #{tpu_custom_call.1} parent=43 // pred_fallthru
          _
        %p616 = scmp.eq.s32.totalorder %s25, 1
        %p617 = pnand %p616, %p306
        %p618 = pneg %p617
        // Predicated region
        $region65: #{tpu_custom_call.1} parent=43 // pred_check
          _
        $region66: #{tpu_custom_call.1} parent=43 // pred_check_branch
          %620 = sbr.rel (%p617) target = $region68
        $region67: #{tpu_custom_call.1} parent=43 // pred_region
          %v621 = vld [vmem:[#allocation3] sm:$0xf]
          %v622 = vld [vmem:[#allocation3 + $0x4] sm:$0xf]
          %v623 = vld [vmem:[#allocation3 + $0x8] sm:$0xf]
          %v624 = vld [vmem:[#allocation3 + $0xc] sm:$0xf]
          %v625 = vld [vmem:[#allocation3 + $0x10] sm:$0xf]
          %v626 = vld [vmem:[#allocation3 + $0x14] sm:$0xf]
          %v627 = vld [vmem:[#allocation3 + $0x18] sm:$0xf]
          %v628 = vld [vmem:[#allocation3 + $0x1c] sm:$0xf]
          %v629 = vld [vmem:[#allocation3 + $0x20] sm:$0xf]
          %v630 = vld [vmem:[#allocation3 + $0x24] sm:$0xf]
          %v631 = vld [vmem:[#allocation3 + $0x28] sm:$0xf]
          %v632 = vld [vmem:[#allocation3 + $0x2c] sm:$0xf]
          %v633 = vld [vmem:[#allocation3 + $0x30] sm:$0xf]
          %v634 = vld [vmem:[#allocation3 + $0x34] sm:$0xf]
          %v635 = vld [vmem:[#allocation3 + $0x38] sm:$0xf]
          %v636 = vld [vmem:[#allocation3 + $0x3c] sm:$0xf]
          %v637 = vld [vmem:[#allocation10] sm:$0xf]
          %v638 = vld [vmem:[#allocation10 + $0x4] sm:$0xf]
          %v639 = vld [vmem:[#allocation10 + $0x8] sm:$0xf]
          %v640 = vld [vmem:[#allocation10 + $0xc] sm:$0xf]
          %v641 = vld [vmem:[#allocation10 + $0x10] sm:$0xf]
          %v642 = vld [vmem:[#allocation10 + $0x14] sm:$0xf]
          %v643 = vld [vmem:[#allocation10 + $0x18] sm:$0xf]
          %v644 = vld [vmem:[#allocation10 + $0x1c] sm:$0xf]
          %v645 = vld [vmem:[#allocation10 + $0x20] sm:$0xf]
          %v646 = vld [vmem:[#allocation10 + $0x24] sm:$0xf]
          %v647 = vld [vmem:[#allocation10 + $0x28] sm:$0xf]
          %v648 = vld [vmem:[#allocation10 + $0x2c] sm:$0xf]
          %v649 = vld [vmem:[#allocation10 + $0x30] sm:$0xf]
          %v650 = vld [vmem:[#allocation10 + $0x34] sm:$0xf]
          %v651 = vld [vmem:[#allocation10 + $0x38] sm:$0xf]
          %v652 = vld [vmem:[#allocation10 + $0x3c] sm:$0xf]
          %v669 = vunpack.c.l.b16 %v621
          %v670 = vunpack.c.l.b16 %v622
          %v671 = vunpack.c.l.b16 %v623
          %v672 = vunpack.c.l.b16 %v624
          %v673 = vunpack.c.l.b16 %v625
          %v674 = vunpack.c.l.b16 %v626
          %v675 = vunpack.c.l.b16 %v627
          %v676 = vunpack.c.l.b16 %v628
          %v677 = vunpack.c.l.b16 %v629
          %v678 = vunpack.c.l.b16 %v630
          %v679 = vunpack.c.l.b16 %v631
          %v680 = vunpack.c.l.b16 %v632
          %v681 = vunpack.c.l.b16 %v633
          %v682 = vunpack.c.l.b16 %v634
          %v683 = vunpack.c.l.b16 %v635
          %v684 = vunpack.c.l.b16 %v636
          %v685 = vpack.c.b16 %v670, %v669
          %v686 = vpack.c.b16 %v672, %v671
          %v687 = vpack.c.b16 %v674, %v673
          %v688 = vpack.c.b16 %v676, %v675
          %v689 = vpack.c.b16 %v678, %v677
          %v690 = vpack.c.b16 %v680, %v679
          %v691 = vpack.c.b16 %v682, %v681
          %v692 = vpack.c.b16 %v684, %v683
          %v717 = vunpack.c.l.b16 %v637
          %v718 = vunpack.c.l.b16 %v638
          %v719 = vunpack.c.l.b16 %v639
          %v720 = vunpack.c.l.b16 %v640
          %v721 = vunpack.c.l.b16 %v641
          %v722 = vunpack.c.l.b16 %v642
          %v723 = vunpack.c.l.b16 %v643
          %v724 = vunpack.c.l.b16 %v644
          %v725 = vunpack.c.l.b16 %v645
          %v726 = vunpack.c.l.b16 %v646
          %v727 = vunpack.c.l.b16 %v647
          %v728 = vunpack.c.l.b16 %v648
          %v729 = vunpack.c.l.b16 %v649
          %v730 = vunpack.c.l.b16 %v650
          %v731 = vunpack.c.l.b16 %v651
          %v732 = vunpack.c.l.b16 %v652
          %v733 = vpack.c.b16 %v718, %v717
          %v734 = vpack.c.b16 %v720, %v719
          %v735 = vpack.c.b16 %v722, %v721
          %v736 = vpack.c.b16 %v724, %v723
          %v737 = vpack.c.b16 %v726, %v725
          %v738 = vpack.c.b16 %v728, %v727
          %v739 = vpack.c.b16 %v730, %v729
          %v740 = vpack.c.b16 %v732, %v731
          %749 = vmatprep.subr.bf16.mxu0 0
          %750 = vmatpush1.bf16.msra.mxu0 %v740
          %751 = vmatprep.subr.bf16.mxu0 0
          %752 = vmatpush1.bf16.msra.mxu0 %v739
          %753 = vmatprep.subr.bf16.mxu0 0
          %754 = vmatpush1.bf16.msra.mxu0 %v738
          %755 = vmatprep.subr.bf16.mxu0 0
          %756 = vmatpush1.bf16.msra.mxu0 %v737
          %757 = vmatprep.subr.bf16.mxu0 0
          %758 = vmatpush1.bf16.msra.mxu0 %v736
          %759 = vmatprep.subr.bf16.mxu0 0
          %760 = vmatpush1.bf16.msra.mxu0 %v735
          %761 = vmatprep.subr.bf16.mxu0 0
          %762 = vmatpush1.bf16.msra.mxu0 %v734
          %763 = vmatprep.subr.bf16.mxu0 0
          %764 = vmatpush1.bf16.msra.mxu0 %v733
          %765 = vmatprep.subr.bf16.mxu0 0
          %766 = vmatpush2.bf16.msra.mxu0 0
          %767 = vmatprep.subr.bf16.mxu0 0
          %768 = vmatpush2.bf16.msra.mxu0 0
          %769 = vmatprep.subr.bf16.mxu0 0
          %770 = vmatpush2.bf16.msra.mxu0 0
          %771 = vmatprep.subr.bf16.mxu0 0
          %772 = vmatpush2.bf16.msra.mxu0 0
          %773 = vmatprep.subr.bf16.mxu0 0
          %774 = vmatpush2.bf16.msra.mxu0 0
          %775 = vmatprep.subr.bf16.mxu0 0
          %776 = vmatpush2.bf16.msra.mxu0 0
          %777 = vmatprep.subr.bf16.mxu0 0
          %778 = vmatpush2.bf16.msra.mxu0 0
          %779 = vmatprep.subr.bf16.mxu0 0
          %780 = vmatpush2.bf16.msra.mxu0 0
          %781 = vmatprep.mubr.bf16.mxu0 0
          %782 = vmatmul.mubr.bf16.gmra.mxu0 %v685
          %v783 = vpop.f32.mrf.mxu0
          %v784 = vadd.f32 0.0, %v783
          %v785 = vpop.f32.mrf.mxu0
          %v786 = vpop.f32.mrf.mxu0
          %v787 = vadd.f32 0.0, %v786
          %v788 = vpop.f32.mrf.mxu0
          %789 = vmatprep.mubr.bf16.mxu0 0
          %790 = vmatmul.mubr.bf16.gmra.mxu0 %v686
          %v791 = vpop.f32.mrf.mxu0
          %v792 = vadd.f32 0.0, %v791
          %v793 = vpop.f32.mrf.mxu0
          %v794 = vpop.f32.mrf.mxu0
          %v795 = vadd.f32 0.0, %v794
          %v796 = vpop.f32.mrf.mxu0
          %797 = vmatprep.mubr.bf16.mxu0 0
          %798 = vmatmul.mubr.bf16.gmra.mxu0 %v687
          %v799 = vpop.f32.mrf.mxu0
          %v800 = vadd.f32 0.0, %v799
          %v801 = vpop.f32.mrf.mxu0
          %v802 = vpop.f32.mrf.mxu0
          %v803 = vadd.f32 0.0, %v802
          %v804 = vpop.f32.mrf.mxu0
          %805 = vmatprep.mubr.bf16.mxu0 0
          %806 = vmatmul.mubr.bf16.gmra.mxu0 %v688
          %v807 = vpop.f32.mrf.mxu0
          %v808 = vadd.f32 0.0, %v807
          %v809 = vpop.f32.mrf.mxu0
          %v810 = vpop.f32.mrf.mxu0
          %v811 = vadd.f32 0.0, %v810
          %v812 = vpop.f32.mrf.mxu0
          %813 = vmatprep.mubr.bf16.mxu0 0
          %814 = vmatmul.mubr.bf16.gmra.mxu0 %v689
          %v815 = vpop.f32.mrf.mxu0
          %v816 = vadd.f32 0.0, %v815
          %v817 = vpop.f32.mrf.mxu0
          %v818 = vpop.f32.mrf.mxu0
          %v819 = vadd.f32 0.0, %v818
          %v820 = vpop.f32.mrf.mxu0
          %821 = vmatprep.mubr.bf16.mxu0 0
          %822 = vmatmul.mubr.bf16.gmra.mxu0 %v690
          %v823 = vpop.f32.mrf.mxu0
          %v824 = vadd.f32 0.0, %v823
          %v825 = vpop.f32.mrf.mxu0
          %v826 = vpop.f32.mrf.mxu0
          %v827 = vadd.f32 0.0, %v826
          %v828 = vpop.f32.mrf.mxu0
          %829 = vmatprep.mubr.bf16.mxu0 0
          %830 = vmatmul.mubr.bf16.gmra.mxu0 %v691
          %v831 = vpop.f32.mrf.mxu0
          %v832 = vadd.f32 0.0, %v831
          %v833 = vpop.f32.mrf.mxu0
          %v834 = vpop.f32.mrf.mxu0
          %v835 = vadd.f32 0.0, %v834
          %v836 = vpop.f32.mrf.mxu0
          %837 = vmatprep.mubr.bf16.mxu0 0
          %838 = vmatmul.mubr.bf16.gmra.mxu0 %v692
          %v839 = vpop.f32.mrf.mxu0
          %v840 = vadd.f32 0.0, %v839
          %v841 = vpop.f32.mrf.mxu0
          %v842 = vpop.f32.mrf.mxu0
          %v843 = vadd.f32 0.0, %v842
          %v844 = vpop.f32.mrf.mxu0
          %845 = vdwg.mxu0
          %v846 = vpack.c.bf16 %v787, %v784
          %v847 = vpack.c.bf16 %v795, %v792
          %v848 = vpack.c.bf16 %v803, %v800
          %v849 = vpack.c.bf16 %v811, %v808
          %v850 = vpack.c.bf16 %v819, %v816
          %v851 = vpack.c.bf16 %v827, %v824
          %v852 = vpack.c.bf16 %v835, %v832
          %v853 = vpack.c.bf16 %v843, %v840
          %v862 = vunpack.c.l.b16 %v846
          %v863 = vunpack.c.h.b16 %v846
          %v864 = vunpack.c.l.b16 %v847
          %v865 = vunpack.c.h.b16 %v847
          %v866 = vunpack.c.l.b16 %v848
          %v867 = vunpack.c.h.b16 %v848
          %v868 = vunpack.c.l.b16 %v849
          %v869 = vunpack.c.h.b16 %v849
          %v870 = vunpack.c.l.b16 %v850
          %v871 = vunpack.c.h.b16 %v850
          %v872 = vunpack.c.l.b16 %v851
          %v873 = vunpack.c.h.b16 %v851
          %v874 = vunpack.c.l.b16 %v852
          %v875 = vunpack.c.h.b16 %v852
          %v876 = vunpack.c.l.b16 %v853
          %v877 = vunpack.c.h.b16 %v853
          %v878 = vpack.c.b16 %v862, %v862
          %v879 = vpack.c.b16 %v863, %v863
          %v880 = vpack.c.b16 %v864, %v864
          %v881 = vpack.c.b16 %v865, %v865
          %v882 = vpack.c.b16 %v866, %v866
          %v883 = vpack.c.b16 %v867, %v867
          %v884 = vpack.c.b16 %v868, %v868
          %v885 = vpack.c.b16 %v869, %v869
          %v886 = vpack.c.b16 %v870, %v870
          %v887 = vpack.c.b16 %v871, %v871
          %v888 = vpack.c.b16 %v872, %v872
          %v889 = vpack.c.b16 %v873, %v873
          %v890 = vpack.c.b16 %v874, %v874
          %v891 = vpack.c.b16 %v875, %v875
          %v892 = vpack.c.b16 %v876, %v876
          %v893 = vpack.c.b16 %v877, %v877
          %910 = vst [vmem:[#allocation2] sm:$0xf] %v878
          %911 = vst [vmem:[#allocation2 + $0x4] sm:$0xf] %v879
          %912 = vst [vmem:[#allocation2 + $0x8] sm:$0xf] %v880
          %913 = vst [vmem:[#allocation2 + $0xc] sm:$0xf] %v881
          %914 = vst [vmem:[#allocation2 + $0x10] sm:$0xf] %v882
          %915 = vst [vmem:[#allocation2 + $0x14] sm:$0xf] %v883
          %916 = vst [vmem:[#allocation2 + $0x18] sm:$0xf] %v884
          %917 = vst [vmem:[#allocation2 + $0x1c] sm:$0xf] %v885
          %918 = vst [vmem:[#allocation2 + $0x20] sm:$0xf] %v886
          %919 = vst [vmem:[#allocation2 + $0x24] sm:$0xf] %v887
          %920 = vst [vmem:[#allocation2 + $0x28] sm:$0xf] %v888
          %921 = vst [vmem:[#allocation2 + $0x2c] sm:$0xf] %v889
          %922 = vst [vmem:[#allocation2 + $0x30] sm:$0xf] %v890
          %923 = vst [vmem:[#allocation2 + $0x34] sm:$0xf] %v891
          %924 = vst [vmem:[#allocation2 + $0x38] sm:$0xf] %v892
          %925 = vst [vmem:[#allocation2 + $0x3c] sm:$0xf] %v893
        $region68: #{tpu_custom_call.1} parent=43 // pred_fallthru
          _
        %s926 = smul.u32 %s26, 128
        // Predicated region
        $region69: #{tpu_custom_call.1} parent=43 // pred_check
          %p927 = pneg %p305
        $region70: #{tpu_custom_call.1} parent=43 // pred_check_branch
          %929 = sbr.rel (%p927) target = $region72
        $region71: #{tpu_custom_call.1} parent=43 // pred_region
          %v930 = vld [vmem:[#allocation4] sm:$0xf]
          %v931 = vld [vmem:[#allocation4 + $0x4] sm:$0xf]
          %v932 = vld [vmem:[#allocation4 + $0x8] sm:$0xf]
          %v933 = vld [vmem:[#allocation4 + $0xc] sm:$0xf]
          %v934 = vld [vmem:[#allocation4 + $0x10] sm:$0xf]
          %v935 = vld [vmem:[#allocation4 + $0x14] sm:$0xf]
          %v936 = vld [vmem:[#allocation4 + $0x18] sm:$0xf]
          %v937 = vld [vmem:[#allocation4 + $0x1c] sm:$0xf]
          %v938 = vld [vmem:[#allocation4 + $0x20] sm:$0xf]
          %v939 = vld [vmem:[#allocation4 + $0x24] sm:$0xf]
          %v940 = vld [vmem:[#allocation4 + $0x28] sm:$0xf]
          %v941 = vld [vmem:[#allocation4 + $0x2c] sm:$0xf]
          %v942 = vld [vmem:[#allocation4 + $0x30] sm:$0xf]
          %v943 = vld [vmem:[#allocation4 + $0x34] sm:$0xf]
          %v944 = vld [vmem:[#allocation4 + $0x38] sm:$0xf]
          %v945 = vld [vmem:[#allocation4 + $0x3c] sm:$0xf]
          %v946 = vld [vmem:[#allocation2] sm:$0xf]
          %v947 = vld [vmem:[#allocation2 + $0x4] sm:$0xf]
          %v948 = vld [vmem:[#allocation2 + $0x8] sm:$0xf]
          %v949 = vld [vmem:[#allocation2 + $0xc] sm:$0xf]
          %v950 = vld [vmem:[#allocation2 + $0x10] sm:$0xf]
          %v951 = vld [vmem:[#allocation2 + $0x14] sm:$0xf]
          %v952 = vld [vmem:[#allocation2 + $0x18] sm:$0xf]
          %v953 = vld [vmem:[#allocation2 + $0x1c] sm:$0xf]
          %v954 = vld [vmem:[#allocation2 + $0x20] sm:$0xf]
          %v955 = vld [vmem:[#allocation2 + $0x24] sm:$0xf]
          %v956 = vld [vmem:[#allocation2 + $0x28] sm:$0xf]
          %v957 = vld [vmem:[#allocation2 + $0x2c] sm:$0xf]
          %v958 = vld [vmem:[#allocation2 + $0x30] sm:$0xf]
          %v959 = vld [vmem:[#allocation2 + $0x34] sm:$0xf]
          %v960 = vld [vmem:[#allocation2 + $0x38] sm:$0xf]
          %v961 = vld [vmem:[#allocation2 + $0x3c] sm:$0xf]
          %v962 = vld [vmem:[%s3] sm:$0x1]
          %v964 = vlaneseq
          %v965 = vshrl.u32 %v964, 7
          %v966 = vsub.s32 0, %v965
          %v967 = vrot.slane %v962, %v966
          %v985 = vunpack.c.l.b16 %v930
          %v986 = vunpack.c.l.b16 %v931
          %v987 = vunpack.c.l.b16 %v932
          %v988 = vunpack.c.l.b16 %v933
          %v989 = vunpack.c.l.b16 %v934
          %v990 = vunpack.c.l.b16 %v935
          %v991 = vunpack.c.l.b16 %v936
          %v992 = vunpack.c.l.b16 %v937
          %v993 = vunpack.c.l.b16 %v938
          %v994 = vunpack.c.l.b16 %v939
          %v995 = vunpack.c.l.b16 %v940
          %v996 = vunpack.c.l.b16 %v941
          %v997 = vunpack.c.l.b16 %v942
          %v998 = vunpack.c.l.b16 %v943
          %v999 = vunpack.c.l.b16 %v944
          %v1000 = vunpack.c.l.b16 %v945
          %v1001 = vpack.c.b16 %v986, %v985
          %v1002 = vpack.c.b16 %v988, %v987
          %v1003 = vpack.c.b16 %v990, %v989
          %v1004 = vpack.c.b16 %v992, %v991
          %v1005 = vpack.c.b16 %v994, %v993
          %v1006 = vpack.c.b16 %v996, %v995
          %v1007 = vpack.c.b16 %v998, %v997
          %v1008 = vpack.c.b16 %v1000, %v999
          %v1033 = vunpack.c.l.b16 %v946
          %v1034 = vunpack.c.l.b16 %v947
          %v1035 = vunpack.c.l.b16 %v948
          %v1036 = vunpack.c.l.b16 %v949
          %v1037 = vunpack.c.l.b16 %v950
          %v1038 = vunpack.c.l.b16 %v951
          %v1039 = vunpack.c.l.b16 %v952
          %v1040 = vunpack.c.l.b16 %v953
          %v1041 = vunpack.c.l.b16 %v954
          %v1042 = vunpack.c.l.b16 %v955
          %v1043 = vunpack.c.l.b16 %v956
          %v1044 = vunpack.c.l.b16 %v957
          %v1045 = vunpack.c.l.b16 %v958
          %v1046 = vunpack.c.l.b16 %v959
          %v1047 = vunpack.c.l.b16 %v960
          %v1048 = vunpack.c.l.b16 %v961
          %v1049 = vpack.c.b16 %v1034, %v1033
          %v1050 = vpack.c.b16 %v1036, %v1035
          %v1051 = vpack.c.b16 %v1038, %v1037
          %v1052 = vpack.c.b16 %v1040, %v1039
          %v1053 = vpack.c.b16 %v1042, %v1041
          %v1054 = vpack.c.b16 %v1044, %v1043
          %v1055 = vpack.c.b16 %v1046, %v1045
          %v1056 = vpack.c.b16 %v1048, %v1047
          %1065 = vmatprep.subr.bf16.mxu0 0
          %1066 = vmatpush1.bf16.msra.mxu0 %v1056
          %1067 = vmatprep.subr.bf16.mxu0 0
          %1068 = vmatpush1.bf16.msra.mxu0 %v1055
          %1069 = vmatprep.subr.bf16.mxu0 0
          %1070 = vmatpush1.bf16.msra.mxu0 %v1054
          %1071 = vmatprep.subr.bf16.mxu0 0
          %1072 = vmatpush1.bf16.msra.mxu0 %v1053
          %1073 = vmatprep.subr.bf16.mxu0 0
          %1074 = vmatpush1.bf16.msra.mxu0 %v1052
          %1075 = vmatprep.subr.bf16.mxu0 0
          %1076 = vmatpush1.bf16.msra.mxu0 %v1051
          %1077 = vmatprep.subr.bf16.mxu0 0
          %1078 = vmatpush1.bf16.msra.mxu0 %v1050
          %1079 = vmatprep.subr.bf16.mxu0 0
          %1080 = vmatpush1.bf16.msra.mxu0 %v1049
          %1081 = vmatprep.subr.bf16.mxu0 0
          %1082 = vmatpush2.bf16.msra.mxu0 0
          %1083 = vmatprep.subr.bf16.mxu0 0
          %1084 = vmatpush2.bf16.msra.mxu0 0
          %1085 = vmatprep.subr.bf16.mxu0 0
          %1086 = vmatpush2.bf16.msra.mxu0 0
          %1087 = vmatprep.subr.bf16.mxu0 0
          %1088 = vmatpush2.bf16.msra.mxu0 0
          %1089 = vmatprep.subr.bf16.mxu0 0
          %1090 = vmatpush2.bf16.msra.mxu0 0
          %1091 = vmatprep.subr.bf16.mxu0 0
          %1092 = vmatpush2.bf16.msra.mxu0 0
          %1093 = vmatprep.subr.bf16.mxu0 0
          %1094 = vmatpush2.bf16.msra.mxu0 0
          %1095 = vmatprep.subr.bf16.mxu0 0
          %1096 = vmatpush2.bf16.msra.mxu0 0
          %1097 = vmatprep.mubr.bf16.mxu0 0
          %1098 = vmatmul.mubr.bf16.gmra.mxu0 %v1001
          %v1099 = vpop.f32.mrf.mxu0
          %v1100 = vadd.f32 %v967, %v1099
          %v1101 = vpop.f32.mrf.mxu0
          %v1102 = vpop.f32.mrf.mxu0
          %v1103 = vadd.f32 %v967, %v1102
          %v1104 = vpop.f32.mrf.mxu0
          %1105 = vmatprep.mubr.bf16.mxu0 0
          %1106 = vmatmul.mubr.bf16.gmra.mxu0 %v1002
          %v1107 = vpop.f32.mrf.mxu0
          %v1108 = vadd.f32 %v967, %v1107
          %v1109 = vpop.f32.mrf.mxu0
          %v1110 = vpop.f32.mrf.mxu0
          %v1111 = vadd.f32 %v967, %v1110
          %v1112 = vpop.f32.mrf.mxu0
          %1113 = vmatprep.mubr.bf16.mxu0 0
          %1114 = vmatmul.mubr.bf16.gmra.mxu0 %v1003
          %v1115 = vpop.f32.mrf.mxu0
          %v1116 = vadd.f32 %v967, %v1115
          %v1117 = vpop.f32.mrf.mxu0
          %v1118 = vpop.f32.mrf.mxu0
          %v1119 = vadd.f32 %v967, %v1118
          %v1120 = vpop.f32.mrf.mxu0
          %1121 = vmatprep.mubr.bf16.mxu0 0
          %1122 = vmatmul.mubr.bf16.gmra.mxu0 %v1004
          %v1123 = vpop.f32.mrf.mxu0
          %v1124 = vadd.f32 %v967, %v1123
          %v1125 = vpop.f32.mrf.mxu0
          %v1126 = vpop.f32.mrf.mxu0
          %v1127 = vadd.f32 %v967, %v1126
          %v1128 = vpop.f32.mrf.mxu0
          %1129 = vmatprep.mubr.bf16.mxu0 0
          %1130 = vmatmul.mubr.bf16.gmra.mxu0 %v1005
          %v1131 = vpop.f32.mrf.mxu0
          %v1132 = vadd.f32 %v967, %v1131
          %v1133 = vpop.f32.mrf.mxu0
          %v1134 = vpop.f32.mrf.mxu0
          %v1135 = vadd.f32 %v967, %v1134
          %v1136 = vpop.f32.mrf.mxu0
          %1137 = vmatprep.mubr.bf16.mxu0 0
          %1138 = vmatmul.mubr.bf16.gmra.mxu0 %v1006
          %v1139 = vpop.f32.mrf.mxu0
          %v1140 = vadd.f32 %v967, %v1139
          %v1141 = vpop.f32.mrf.mxu0
          %v1142 = vpop.f32.mrf.mxu0
          %v1143 = vadd.f32 %v967, %v1142
          %v1144 = vpop.f32.mrf.mxu0
          %1145 = vmatprep.mubr.bf16.mxu0 0
          %1146 = vmatmul.mubr.bf16.gmra.mxu0 %v1007
          %v1147 = vpop.f32.mrf.mxu0
          %v1148 = vadd.f32 %v967, %v1147
          %v1149 = vpop.f32.mrf.mxu0
          %v1150 = vpop.f32.mrf.mxu0
          %v1151 = vadd.f32 %v967, %v1150
          %v1152 = vpop.f32.mrf.mxu0
          %1153 = vmatprep.mubr.bf16.mxu0 0
          %1154 = vmatmul.mubr.bf16.gmra.mxu0 %v1008
          %v1155 = vpop.f32.mrf.mxu0
          %v1156 = vadd.f32 %v967, %v1155
          %v1157 = vpop.f32.mrf.mxu0
          %v1158 = vpop.f32.mrf.mxu0
          %v1159 = vadd.f32 %v967, %v1158
          %v1160 = vpop.f32.mrf.mxu0
          %1161 = vdwg.mxu0
          %v1162 = vmax.f32 %v1100, 0.0
          %v1163 = vmax.f32 %v1103, 0.0
          %v1164 = vmax.f32 %v1108, 0.0
          %v1165 = vmax.f32 %v1111, 0.0
          %v1166 = vmax.f32 %v1116, 0.0
          %v1167 = vmax.f32 %v1119, 0.0
          %v1168 = vmax.f32 %v1124, 0.0
          %v1169 = vmax.f32 %v1127, 0.0
          %v1170 = vmax.f32 %v1132, 0.0
          %v1171 = vmax.f32 %v1135, 0.0
          %v1172 = vmax.f32 %v1140, 0.0
          %v1173 = vmax.f32 %v1143, 0.0
          %v1174 = vmax.f32 %v1148, 0.0
          %v1175 = vmax.f32 %v1151, 0.0
          %v1176 = vmax.f32 %v1156, 0.0
          %v1177 = vmax.f32 %v1159, 0.0
          %v1178 = vpack.c.bf16 %v1163, %v1162
          %v1179 = vpack.c.bf16 %v1165, %v1164
          %v1180 = vpack.c.bf16 %v1167, %v1166
          %v1181 = vpack.c.bf16 %v1169, %v1168
          %v1182 = vpack.c.bf16 %v1171, %v1170
          %v1183 = vpack.c.bf16 %v1173, %v1172
          %v1184 = vpack.c.bf16 %v1175, %v1174
          %v1185 = vpack.c.bf16 %v1177, %v1176
          %v1194 = vunpack.c.l.b16 %v1178
          %v1195 = vunpack.c.h.b16 %v1178
          %v1196 = vunpack.c.l.b16 %v1179
          %v1197 = vunpack.c.h.b16 %v1179
          %v1198 = vunpack.c.l.b16 %v1180
          %v1199 = vunpack.c.h.b16 %v1180
          %v1200 = vunpack.c.l.b16 %v1181
          %v1201 = vunpack.c.h.b16 %v1181
          %v1202 = vunpack.c.l.b16 %v1182
          %v1203 = vunpack.c.h.b16 %v1182
          %v1204 = vunpack.c.l.b16 %v1183
          %v1205 = vunpack.c.h.b16 %v1183
          %v1206 = vunpack.c.l.b16 %v1184
          %v1207 = vunpack.c.h.b16 %v1184
          %v1208 = vunpack.c.l.b16 %v1185
          %v1209 = vunpack.c.h.b16 %v1185
          %v1210 = vpack.c.b16 %v1194, %v1194
          %v1211 = vpack.c.b16 %v1195, %v1195
          %v1212 = vpack.c.b16 %v1196, %v1196
          %v1213 = vpack.c.b16 %v1197, %v1197
          %v1214 = vpack.c.b16 %v1198, %v1198
          %v1215 = vpack.c.b16 %v1199, %v1199
          %v1216 = vpack.c.b16 %v1200, %v1200
          %v1217 = vpack.c.b16 %v1201, %v1201
          %v1218 = vpack.c.b16 %v1202, %v1202
          %v1219 = vpack.c.b16 %v1203, %v1203
          %v1220 = vpack.c.b16 %v1204, %v1204
          %v1221 = vpack.c.b16 %v1205, %v1205
          %v1222 = vpack.c.b16 %v1206, %v1206
          %v1223 = vpack.c.b16 %v1207, %v1207
          %v1224 = vpack.c.b16 %v1208, %v1208
          %v1225 = vpack.c.b16 %v1209, %v1209
          %s1242 = sshra.s32 %s926, 3
          %s1243 = sand.u32 %s926, 7
          %s1244 = smul.addr %s1242, 4
          %s1245 = scalar_lea.vmem [#allocation3], %s1244
          %1246 = vst [vmem:[%s1245] sm:$0xf] %v1210
          %1247 = vst [vmem:[%s1245 + $0x4] sm:$0xf] %v1211
          %1248 = vst [vmem:[%s1245 + $0x8] sm:$0xf] %v1212
          %1249 = vst [vmem:[%s1245 + $0xc] sm:$0xf] %v1213
          %1250 = vst [vmem:[%s1245 + $0x10] sm:$0xf] %v1214
          %1251 = vst [vmem:[%s1245 + $0x14] sm:$0xf] %v1215
          %1252 = vst [vmem:[%s1245 + $0x18] sm:$0xf] %v1216
          %1253 = vst [vmem:[%s1245 + $0x1c] sm:$0xf] %v1217
          %1254 = vst [vmem:[%s1245 + $0x20] sm:$0xf] %v1218
          %1255 = vst [vmem:[%s1245 + $0x24] sm:$0xf] %v1219
          %1256 = vst [vmem:[%s1245 + $0x28] sm:$0xf] %v1220
          %1257 = vst [vmem:[%s1245 + $0x2c] sm:$0xf] %v1221
          %1258 = vst [vmem:[%s1245 + $0x30] sm:$0xf] %v1222
          %1259 = vst [vmem:[%s1245 + $0x34] sm:$0xf] %v1223
          %1260 = vst [vmem:[%s1245 + $0x38] sm:$0xf] %v1224
          %1261 = vst [vmem:[%s1245 + $0x3c] sm:$0xf] %v1225
        $region72: #{tpu_custom_call.1} parent=43 // pred_fallthru
          _
        // Predicated region
        $region73: #{tpu_custom_call.1} parent=43 // pred_check
          %p1262 = pneg %p616
        $region74: #{tpu_custom_call.1} parent=43 // pred_check_branch
          %1264 = sbr.rel (%p1262) target = $region76
        $region75: #{tpu_custom_call.1} parent=43 // pred_region
          %v1265 = vld [vmem:[#allocation4] sm:$0xf]
          %v1266 = vld [vmem:[#allocation4 + $0x4] sm:$0xf]
          %v1267 = vld [vmem:[#allocation4 + $0x8] sm:$0xf]
          %v1268 = vld [vmem:[#allocation4 + $0xc] sm:$0xf]
          %v1269 = vld [vmem:[#allocation4 + $0x10] sm:$0xf]
          %v1270 = vld [vmem:[#allocation4 + $0x14] sm:$0xf]
          %v1271 = vld [vmem:[#allocation4 + $0x18] sm:$0xf]
          %v1272 = vld [vmem:[#allocation4 + $0x1c] sm:$0xf]
          %v1273 = vld [vmem:[#allocation4 + $0x20] sm:$0xf]
          %v1274 = vld [vmem:[#allocation4 + $0x24] sm:$0xf]
          %v1275 = vld [vmem:[#allocation4 + $0x28] sm:$0xf]
          %v1276 = vld [vmem:[#allocation4 + $0x2c] sm:$0xf]
          %v1277 = vld [vmem:[#allocation4 + $0x30] sm:$0xf]
          %v1278 = vld [vmem:[#allocation4 + $0x34] sm:$0xf]
          %v1279 = vld [vmem:[#allocation4 + $0x38] sm:$0xf]
          %v1280 = vld [vmem:[#allocation4 + $0x3c] sm:$0xf]
          %v1281 = vld [vmem:[#allocation2] sm:$0xf]
          %v1282 = vld [vmem:[#allocation2 + $0x4] sm:$0xf]
          %v1283 = vld [vmem:[#allocation2 + $0x8] sm:$0xf]
          %v1284 = vld [vmem:[#allocation2 + $0xc] sm:$0xf]
          %v1285 = vld [vmem:[#allocation2 + $0x10] sm:$0xf]
          %v1286 = vld [vmem:[#allocation2 + $0x14] sm:$0xf]
          %v1287 = vld [vmem:[#allocation2 + $0x18] sm:$0xf]
          %v1288 = vld [vmem:[#allocation2 + $0x1c] sm:$0xf]
          %v1289 = vld [vmem:[#allocation2 + $0x20] sm:$0xf]
          %v1290 = vld [vmem:[#allocation2 + $0x24] sm:$0xf]
          %v1291 = vld [vmem:[#allocation2 + $0x28] sm:$0xf]
          %v1292 = vld [vmem:[#allocation2 + $0x2c] sm:$0xf]
          %v1293 = vld [vmem:[#allocation2 + $0x30] sm:$0xf]
          %v1294 = vld [vmem:[#allocation2 + $0x34] sm:$0xf]
          %v1295 = vld [vmem:[#allocation2 + $0x38] sm:$0xf]
          %v1296 = vld [vmem:[#allocation2 + $0x3c] sm:$0xf]
          %v1297 = vld [vmem:[%s5] sm:$0x1]
          %v1299 = vlaneseq
          %v1300 = vshrl.u32 %v1299, 7
          %v1301 = vsub.s32 0, %v1300
          %v1302 = vrot.slane %v1297, %v1301
          %v1320 = vunpack.c.l.b16 %v1265
          %v1321 = vunpack.c.l.b16 %v1266
          %v1322 = vunpack.c.l.b16 %v1267
          %v1323 = vunpack.c.l.b16 %v1268
          %v1324 = vunpack.c.l.b16 %v1269
          %v1325 = vunpack.c.l.b16 %v1270
          %v1326 = vunpack.c.l.b16 %v1271
          %v1327 = vunpack.c.l.b16 %v1272
          %v1328 = vunpack.c.l.b16 %v1273
          %v1329 = vunpack.c.l.b16 %v1274
          %v1330 = vunpack.c.l.b16 %v1275
          %v1331 = vunpack.c.l.b16 %v1276
          %v1332 = vunpack.c.l.b16 %v1277
          %v1333 = vunpack.c.l.b16 %v1278
          %v1334 = vunpack.c.l.b16 %v1279
          %v1335 = vunpack.c.l.b16 %v1280
          %v1336 = vpack.c.b16 %v1321, %v1320
          %v1337 = vpack.c.b16 %v1323, %v1322
          %v1338 = vpack.c.b16 %v1325, %v1324
          %v1339 = vpack.c.b16 %v1327, %v1326
          %v1340 = vpack.c.b16 %v1329, %v1328
          %v1341 = vpack.c.b16 %v1331, %v1330
          %v1342 = vpack.c.b16 %v1333, %v1332
          %v1343 = vpack.c.b16 %v1335, %v1334
          %v1368 = vunpack.c.l.b16 %v1281
          %v1369 = vunpack.c.l.b16 %v1282
          %v1370 = vunpack.c.l.b16 %v1283
          %v1371 = vunpack.c.l.b16 %v1284
          %v1372 = vunpack.c.l.b16 %v1285
          %v1373 = vunpack.c.l.b16 %v1286
          %v1374 = vunpack.c.l.b16 %v1287
          %v1375 = vunpack.c.l.b16 %v1288
          %v1376 = vunpack.c.l.b16 %v1289
          %v1377 = vunpack.c.l.b16 %v1290
          %v1378 = vunpack.c.l.b16 %v1291
          %v1379 = vunpack.c.l.b16 %v1292
          %v1380 = vunpack.c.l.b16 %v1293
          %v1381 = vunpack.c.l.b16 %v1294
          %v1382 = vunpack.c.l.b16 %v1295
          %v1383 = vunpack.c.l.b16 %v1296
          %v1384 = vpack.c.b16 %v1369, %v1368
          %v1385 = vpack.c.b16 %v1371, %v1370
          %v1386 = vpack.c.b16 %v1373, %v1372
          %v1387 = vpack.c.b16 %v1375, %v1374
          %v1388 = vpack.c.b16 %v1377, %v1376
          %v1389 = vpack.c.b16 %v1379, %v1378
          %v1390 = vpack.c.b16 %v1381, %v1380
          %v1391 = vpack.c.b16 %v1383, %v1382
          %1400 = vmatprep.subr.bf16.mxu0 0
          %1401 = vmatpush1.bf16.msra.mxu0 %v1391
          %1402 = vmatprep.subr.bf16.mxu0 0
          %1403 = vmatpush1.bf16.msra.mxu0 %v1390
          %1404 = vmatprep.subr.bf16.mxu0 0
          %1405 = vmatpush1.bf16.msra.mxu0 %v1389
          %1406 = vmatprep.subr.bf16.mxu0 0
          %1407 = vmatpush1.bf16.msra.mxu0 %v1388
          %1408 = vmatprep.subr.bf16.mxu0 0
          %1409 = vmatpush1.bf16.msra.mxu0 %v1387
          %1410 = vmatprep.subr.bf16.mxu0 0
          %1411 = vmatpush1.bf16.msra.mxu0 %v1386
          %1412 = vmatprep.subr.bf16.mxu0 0
          %1413 = vmatpush1.bf16.msra.mxu0 %v1385
          %1414 = vmatprep.subr.bf16.mxu0 0
          %1415 = vmatpush1.bf16.msra.mxu0 %v1384
          %1416 = vmatprep.subr.bf16.mxu0 0
          %1417 = vmatpush2.bf16.msra.mxu0 0
          %1418 = vmatprep.subr.bf16.mxu0 0
          %1419 = vmatpush2.bf16.msra.mxu0 0
          %1420 = vmatprep.subr.bf16.mxu0 0
          %1421 = vmatpush2.bf16.msra.mxu0 0
          %1422 = vmatprep.subr.bf16.mxu0 0
          %1423 = vmatpush2.bf16.msra.mxu0 0
          %1424 = vmatprep.subr.bf16.mxu0 0
          %1425 = vmatpush2.bf16.msra.mxu0 0
          %1426 = vmatprep.subr.bf16.mxu0 0
          %1427 = vmatpush2.bf16.msra.mxu0 0
          %1428 = vmatprep.subr.bf16.mxu0 0
          %1429 = vmatpush2.bf16.msra.mxu0 0
          %1430 = vmatprep.subr.bf16.mxu0 0
          %1431 = vmatpush2.bf16.msra.mxu0 0
          %1432 = vmatprep.mubr.bf16.mxu0 0
          %1433 = vmatmul.mubr.bf16.gmra.mxu0 %v1336
          %v1434 = vpop.f32.mrf.mxu0
          %v1435 = vadd.f32 %v1302, %v1434
          %v1436 = vpop.f32.mrf.mxu0
          %v1437 = vpop.f32.mrf.mxu0
          %v1438 = vadd.f32 %v1302, %v1437
          %v1439 = vpop.f32.mrf.mxu0
          %1440 = vmatprep.mubr.bf16.mxu0 0
          %1441 = vmatmul.mubr.bf16.gmra.mxu0 %v1337
          %v1442 = vpop.f32.mrf.mxu0
          %v1443 = vadd.f32 %v1302, %v1442
          %v1444 = vpop.f32.mrf.mxu0
          %v1445 = vpop.f32.mrf.mxu0
          %v1446 = vadd.f32 %v1302, %v1445
          %v1447 = vpop.f32.mrf.mxu0
          %1448 = vmatprep.mubr.bf16.mxu0 0
          %1449 = vmatmul.mubr.bf16.gmra.mxu0 %v1338
          %v1450 = vpop.f32.mrf.mxu0
          %v1451 = vadd.f32 %v1302, %v1450
          %v1452 = vpop.f32.mrf.mxu0
          %v1453 = vpop.f32.mrf.mxu0
          %v1454 = vadd.f32 %v1302, %v1453
          %v1455 = vpop.f32.mrf.mxu0
          %1456 = vmatprep.mubr.bf16.mxu0 0
          %1457 = vmatmul.mubr.bf16.gmra.mxu0 %v1339
          %v1458 = vpop.f32.mrf.mxu0
          %v1459 = vadd.f32 %v1302, %v1458
          %v1460 = vpop.f32.mrf.mxu0
          %v1461 = vpop.f32.mrf.mxu0
          %v1462 = vadd.f32 %v1302, %v1461
          %v1463 = vpop.f32.mrf.mxu0
          %1464 = vmatprep.mubr.bf16.mxu0 0
          %1465 = vmatmul.mubr.bf16.gmra.mxu0 %v1340
          %v1466 = vpop.f32.mrf.mxu0
          %v1467 = vadd.f32 %v1302, %v1466
          %v1468 = vpop.f32.mrf.mxu0
          %v1469 = vpop.f32.mrf.mxu0
          %v1470 = vadd.f32 %v1302, %v1469
          %v1471 = vpop.f32.mrf.mxu0
          %1472 = vmatprep.mubr.bf16.mxu0 0
          %1473 = vmatmul.mubr.bf16.gmra.mxu0 %v1341
          %v1474 = vpop.f32.mrf.mxu0
          %v1475 = vadd.f32 %v1302, %v1474
          %v1476 = vpop.f32.mrf.mxu0
          %v1477 = vpop.f32.mrf.mxu0
          %v1478 = vadd.f32 %v1302, %v1477
          %v1479 = vpop.f32.mrf.mxu0
          %1480 = vmatprep.mubr.bf16.mxu0 0
          %1481 = vmatmul.mubr.bf16.gmra.mxu0 %v1342
          %v1482 = vpop.f32.mrf.mxu0
          %v1483 = vadd.f32 %v1302, %v1482
          %v1484 = vpop.f32.mrf.mxu0
          %v1485 = vpop.f32.mrf.mxu0
          %v1486 = vadd.f32 %v1302, %v1485
          %v1487 = vpop.f32.mrf.mxu0
          %1488 = vmatprep.mubr.bf16.mxu0 0
          %1489 = vmatmul.mubr.bf16.gmra.mxu0 %v1343
          %v1490 = vpop.f32.mrf.mxu0
          %v1491 = vadd.f32 %v1302, %v1490
          %v1492 = vpop.f32.mrf.mxu0
          %v1493 = vpop.f32.mrf.mxu0
          %v1494 = vadd.f32 %v1302, %v1493
          %v1495 = vpop.f32.mrf.mxu0
          %1496 = vdwg.mxu0
          %v1497 = vmax.f32 %v1435, 0.0
          %v1498 = vmax.f32 %v1438, 0.0
          %v1499 = vmax.f32 %v1443, 0.0
          %v1500 = vmax.f32 %v1446, 0.0
          %v1501 = vmax.f32 %v1451, 0.0
          %v1502 = vmax.f32 %v1454, 0.0
          %v1503 = vmax.f32 %v1459, 0.0
          %v1504 = vmax.f32 %v1462, 0.0
          %v1505 = vmax.f32 %v1467, 0.0
          %v1506 = vmax.f32 %v1470, 0.0
          %v1507 = vmax.f32 %v1475, 0.0
          %v1508 = vmax.f32 %v1478, 0.0
          %v1509 = vmax.f32 %v1483, 0.0
          %v1510 = vmax.f32 %v1486, 0.0
          %v1511 = vmax.f32 %v1491, 0.0
          %v1512 = vmax.f32 %v1494, 0.0
          %1513 = vst [vmem:[#allocation12] sm:$0xff] %v1497
          %1514 = vst [vmem:[#allocation12 + $0x8] sm:$0xff] %v1498
          %1515 = vst [vmem:[#allocation12 + $0x10] sm:$0xff] %v1499
          %1516 = vst [vmem:[#allocation12 + $0x18] sm:$0xff] %v1500
          %1517 = vst [vmem:[#allocation12 + $0x20] sm:$0xff] %v1501
          %1518 = vst [vmem:[#allocation12 + $0x28] sm:$0xff] %v1502
          %1519 = vst [vmem:[#allocation12 + $0x30] sm:$0xff] %v1503
          %1520 = vst [vmem:[#allocation12 + $0x38] sm:$0xff] %v1504
          %1521 = vst [vmem:[#allocation12 + $0x40] sm:$0xff] %v1505
          %1522 = vst [vmem:[#allocation12 + $0x48] sm:$0xff] %v1506
          %1523 = vst [vmem:[#allocation12 + $0x50] sm:$0xff] %v1507
          %1524 = vst [vmem:[#allocation12 + $0x58] sm:$0xff] %v1508
          %1525 = vst [vmem:[#allocation12 + $0x60] sm:$0xff] %v1509
          %1526 = vst [vmem:[#allocation12 + $0x68] sm:$0xff] %v1510
          %1527 = vst [vmem:[#allocation12 + $0x70] sm:$0xff] %v1511
          %1528 = vst [vmem:[#allocation12 + $0x78] sm:$0xff] %v1512
        $region76: #{tpu_custom_call.1} parent=43 // pred_fallthru
          _
        // Predicated region
        $region77: #{tpu_custom_call.1} parent=43 // pred_check
          %p1529 = pneg %p182
        $region78: #{tpu_custom_call.1} parent=43 // pred_check_branch
          %1531 = sbr.rel (%p1529) target = $region80
        $region79: #{tpu_custom_call.1} parent=43 // pred_region
          %s1532 = smul.u32 16, %s26
          %s1534 = ssub.s32 2048, 2048
          %1535 = vsyncadd [#allocation6], %s1534
          %s1536 = smul.addr %s1532, 128
          %s1537 = scalar_lea.hbm %s6, %s1536
          %s1538 = sshll.u32 [#allocation12], 4
          %s1539 = int_to_ptr.vmem [resolvable:$true] %s1538
          %1544 = dma.vmem_to_hbm [thread:$0]  %s1539, 2048, %s1537, [#allocation6], 128, 128, 8
        $region80: #{tpu_custom_call.1} parent=43 // pred_fallthru
          _
        // Predicated region
        $region81: #{tpu_custom_call.1} parent=43 // pred_check
          %p1545 = pneg %p182
        $region82: #{tpu_custom_call.1} parent=43 // pred_check_branch
          %1547 = sbr.rel (%p1545) target = $region84
        $region83: #{tpu_custom_call.1} parent=43 // pred_region
          %1548 = dma.done [#allocation6], 2048
        $region84: #{tpu_custom_call.1} parent=43 // pred_fallthru
          _
      $region44: #{tpu_custom_call.1} parent=5 // pred_fallthru
        _
      %p1549 = scmp.le.s32.totalorder 2, %s16
      // Predicated region
      $region85: #{tpu_custom_call.1} parent=5 // pred_check
        %p1550 = pneg %p1549
      $region86: #{tpu_custom_call.1} parent=5 // pred_check_branch
        %1552 = sbr.rel (%p1550) target = $region88
      $region87: #{tpu_custom_call.1} parent=5 // pred_region
        %s1553 = ssub.s32 %s16, 2
      $region88: #{tpu_custom_call.1} parent=5 // pred_fallthru
        _
    $region6: #{tpu_custom_call.1} parent=1 // loop_footer
      %s20 = sadd.s32 1, %s16
    $region7: #{tpu_custom_call.1} parent=1 // loop_footer_branch
      %15 = sbr.rel target = $region3
    $region8: #{tpu_custom_call.1} parent=1 // loop_exit
      _
    %1554 = vsyncpa [#allocation5], 1
    %s1555 = scalar_lea.sflag [#allocation5], 1
    %1556 = vsyncpa %s1555, 1
    %1557 = vsyncpa [#allocation8], 1
    %1558 = vsyncpa [#allocation11], 1
    %1559 = vsyncpa [#allocation6], 1
    %s1560 = scalar_lea.sflag [#allocation6], 1
    %1561 = vsyncpa %s1560, 1

</llo_original>
